<compile_context>
chip_gen: v7x
topology: tpu7x:2x2x1
jax: 0.10.0
libtpu: 0.0.40
codegen_flags: <defaults>
</compile_context>

<pallas_src>
import functools

import jax
import jax.numpy as jnp
import numpy as np
from jax.experimental import pallas as pl
from jax.experimental.pallas import tpu as pltpu


def _round_up(a, b):
    return (a + b - 1) // b * b


def _pad_to(a, shape):
    return jnp.pad(a, [(0, s - d) for d, s in zip(a.shape, shape)])


def gnn_kernel(occ_ref, colmap_ref, adj_ref, deg_ref, xs_ref, xd_ref,
               wl_ref, wr_ref, bl_ref, w1_ref, b1_ref, w2_ref, b2_ref,
               mt_ref, out_ref, agg_ref, *, x_resident):
    i = pl.program_id(0)
    k = pl.program_id(1)

    @pl.when(k == 0)
    def _init():
        agg_ref[...] = jnp.zeros_like(agg_ref)

    tk = adj_ref.shape[1]

    # Neighborhood-sum partial accumulation over source-node (K) tiles.  The adjacency
    # arrives as int8 edge counts; blocks with no edges are skipped entirely (no MXU work,
    # and the index_map remap in the wrapper means no new adjacency DMA either).
    @pl.when(occ_ref[i, k] > 0)
    def _accumulate():
        a = adj_ref[...].astype(jnp.bfloat16)           # int8 -> bf16 (VPU, hidden by DMA)
        if x_resident:
            off = pl.multiple_of(k * tk, tk)
            xs = xs_ref[pl.ds(off, tk), :]              # slice of VMEM-resident x
        else:
            xs = xs_ref[...]                            # streamed (tk, FP) tile
        agg_ref[...] += jnp.dot(a, xs, preferred_element_type=jnp.float32)

    @pl.when(k == pl.num_programs(1) - 1)
    def _finish():
        # Mean aggregation: exact f32 per-destination-row 1/deg scale on the integer sums.
        agg = (agg_ref[...] * deg_ref[...]).astype(jnp.bfloat16)

        # SAGEConv projection as two K=FP MXU passes summed in f32 (no lane-concat copy).
        h = (jnp.dot(agg, wl_ref[...], preferred_element_type=jnp.float32)
             + jnp.dot(xd_ref[...], wr_ref[...], preferred_element_type=jnp.float32)
             + bl_ref[...])

        # FC head: ReLU -> Linear(128,512) -> ReLU -> Linear(512,H) -> Sigmoid
        h = jnp.maximum(h, 0.0).astype(jnp.bfloat16)
        h = jnp.dot(h, w1_ref[...], preferred_element_type=jnp.float32) + b1_ref[...]
        h = jnp.maximum(h, 0.0).astype(jnp.bfloat16)
        h = jnp.dot(h, w2_ref[...], preferred_element_type=jnp.float32) + b2_ref[...]
        y = jax.nn.sigmoid(h)                           # (tn, HP), f32, strictly > 0

        # global_max_pool over this node tile: mask-with-0 + max is exact since y > 0.
        # TODO(synk): restructure as a segment-max over per-tile graph ranges if G grows >~8.
        mt = mt_ref[...]                                # (tn, G) in {0, 1}
        pooled = jnp.concatenate(
            [jnp.max(y * mt[:, g:g + 1], axis=0, keepdims=True)
             for g in range(mt.shape[1])], axis=0)      # (G, HP)
        out_ref[0, :, :] = pooled


def _choose_tiles(n, tile_n):
    """Pick a 128-multiple row/K tile minimizing padded N; prefer >= 2 row tiles (megacore)."""
    n128 = _round_up(max(n, 1), 128)
    cap = max(128, min(_round_up(tile_n, 128), n128))
    cands = list(range(128, cap + 1, 128))
    cost = lambda t: (_round_up(n, t), -t)              # minimize padding, then maximize tile
    tn = min(cands, key=cost)
    if _round_up(n, tn) // tn < 2 and n128 >= 256:      # v7x: use both TensorCores
        two = [t for t in cands if _round_up(n, t) // t >= 2]
        if two:
            tn = min(two, key=cost)
    return tn, _round_up(n, tn)


def gnn_forward(adj_cnt, deg_inv, x, wl, bl, wr, w1, b1, w2, b2, mask, *,
                tile_n=512, x_resident_budget=16 * 1024 * 1024, vmem_limit_bytes=None):
    """adj_cnt: [N,N] int8 edge counts (row = destination), deg_inv: [N] f32 1/in-degree,
    x: [N,Fin] node features, mask: [G,N] one-hot node->graph assignment."""
    N, fin = x.shape
    c1 = wl.shape[1]          # 128
    c2 = w1.shape[1]          # 512
    H = w2.shape[1]
    G = mask.shape[0]

    FP = _round_up(max(fin, 1), 128)      # lane-dense input features
    HP = _round_up(max(H, 1), 128)        # lane-dense output slab
    tn, npad = _choose_tiles(N, tile_n)
    tk = tn
    ni, nk = npad // tn, npad // tk

    bf16, f32 = jnp.bfloat16, jnp.float32
    adj_p = _pad_to(adj_cnt.astype(jnp.int8), (npad, npad))
    deg_p = _pad_to(deg_inv.astype(f32).reshape(N, 1), (npad, 1))
    x_p = _pad_to(x.astype(f32), (npad, FP)).astype(bf16)
    wl_p = _pad_to(wl.astype(f32), (FP, c1)).astype(bf16)
    wr_p = _pad_to(wr.astype(f32), (FP, c1)).astype(bf16)
    bl_p = jnp.reshape(bl, (1, c1)).astype(f32)
    w1_b = w1.astype(bf16)
    b1_p = jnp.reshape(b1, (1, c2)).astype(f32)
    w2_p = _pad_to(w2.astype(f32), (c2, HP)).astype(bf16)
    b2_p = _pad_to(jnp.reshape(b2, (1, H)).astype(f32), (1, HP))
    mask_t = _pad_to(mask.T.astype(f32), (npad, G))     # [Npad, G]

    # Block occupancy (skip empty adjacency tiles) + column remap that repeats the previous
    # non-empty block index on empty steps, so skipped steps never issue a fresh DMA.
    occ = (adj_p.reshape(ni, tn, nk, tk) != 0).any(axis=(1, 3))
    occ_i32 = occ.astype(jnp.int32)
    last_nz = jnp.where(occ, jnp.arange(nk, dtype=jnp.int32)[None, :], -1)
    colmap = jnp.maximum(jax.lax.cummax(last_nz, axis=1), 0).astype(jnp.int32)

    # Keep x fully VMEM-resident when it fits (kills repeated per-row-tile x re-reads).
    x_resident = (2 * npad * FP * 2) <= x_resident_budget

    if vmem_limit_bytes is None:
        est = (2 * tn * tk * 1                                    # adj (int8, double buffered)
               + (2 * npad * FP * 2 if x_resident else 2 * tk * FP * 2)
               + 2 * tn * FP * 2                                  # x dest rows
               + 2 * (2 * FP * c1 + c1 * c2 + c2 * HP) * 2        # Wl, Wr, W1, W2 (bf16)
               + 2 * (c1 + c2 + HP) * 8 * 4                       # biases (sublane-padded)
               + 2 * tn * 128 * 4                                 # deg_inv (lane-padded)
               + 2 * tn * _round_up(G, 128) * 4                   # pool mask (lane-padded)
               + 2 * _round_up(G, 8) * HP * 4                     # output block
               + tn * FP * 4)                                     # f32 accumulator scratch
        vmem_limit_bytes = min(48 * 1024 * 1024,
                               max(16 * 1024 * 1024, int(est * 1.5) + (2 << 20)))

    im_adj = lambda i, k, o, c: (i, c[i, k])
    im_xs = (lambda i, k, o, c: (0, 0)) if x_resident else (lambda i, k, o, c: (c[i, k], 0))
    im_row = lambda i, k, o, c: (i, 0)
    im_const = lambda i, k, o, c: (0, 0)
    im_out = lambda i, k, o, c: (i, 0, 0)

    xs_spec = (pl.BlockSpec((npad, FP), im_xs) if x_resident
               else pl.BlockSpec((tk, FP), im_xs))

    in_specs = [
        pl.BlockSpec((tn, tk), im_adj),       # adjacency tile (int8, block-sparse remapped)
        pl.BlockSpec((tn, 1), im_row),        # 1/deg per destination row
        xs_spec,                              # x source rows (aggregation operand)
        pl.BlockSpec((tn, FP), im_row),       # x dest rows (root/self term)
        pl.BlockSpec((FP, c1), im_const),     # Wl (VMEM-resident)
        pl.BlockSpec((FP, c1), im_const),     # Wr
        pl.BlockSpec((1, c1), im_const),      # bl
        pl.BlockSpec((c1, c2), im_const),     # W1
        pl.BlockSpec((1, c2), im_const),      # b1
        pl.BlockSpec((c2, HP), im_const),     # W2 (lane-padded)
        pl.BlockSpec((1, HP), im_const),      # b2 (lane-padded)
        pl.BlockSpec((tn, G), im_row),        # node->graph one-hot mask (transposed)
    ]
    out_specs = pl.BlockSpec((1, G, HP), im_out)

    kernel = functools.partial(gnn_kernel, x_resident=x_resident)

    partial_max = pl.pallas_call(
        kernel,
        out_shape=jax.ShapeDtypeStruct((ni, G, HP), f32),
        grid_spec=pltpu.PrefetchScalarGridSpec(
            num_scalar_prefetch=2,
            grid=(ni, nk),
            in_specs=in_specs,
            out_specs=out_specs,
            scratch_shapes=[pltpu.VMEM((tn, FP), f32)],   # mean-aggregation accumulator
        ),
        compiler_params=pltpu.CompilerParams(
            dimension_semantics=("parallel", "arbitrary"),
            vmem_limit_bytes=vmem_limit_bytes,
        ),
    )(occ_i32, colmap, adj_p, deg_p, x_p, x_p, wl_p, wr_p, bl_p,
      w1_b, b1_p, w2_p, b2_p, mask_t)

    # Tiny final reduction over row tiles + strip lane padding.
    # NOTE: a graph with zero nodes pools to 0 (not -inf); every graph must have >= 1 node.
    return jnp.max(partial_max, axis=0)[:, :H]


def build_aggregation(edge_index, num_nodes):
    """Edge-count adjacency (messages flow src -> dst) + per-destination 1/deg scale.
    Counts stored as int8 (assumes < 128 parallel edges per ordered node pair)."""
    src, dst = edge_index
    cnt = jnp.zeros((num_nodes, num_nodes), jnp.int32).at[dst, src].add(1)
    deg = cnt.sum(axis=1)
    deg_inv = jnp.where(deg > 0, 1.0 / jnp.maximum(deg, 1).astype(jnp.float32), 0.0)
    return cnt.astype(jnp.int8), deg_inv.astype(jnp.float32)


def build_pool_mask(batch, num_graphs):
    return (batch[None, :] == jnp.arange(num_graphs)[:, None]).astype(jnp.float32)


def reference_forward(adj_cnt, deg_inv, x, wl, bl, wr, w1, b1, w2, b2, mask):
    agg = deg_inv[:, None] * (adj_cnt.astype(jnp.float32) @ x)
    h = agg @ wl + bl + x @ wr
    h = jnp.maximum(h, 0.0) @ w1 + b1
    h = jnp.maximum(h, 0.0) @ w2 + b2
    y = jax.nn.sigmoid(h)
    return jnp.max(jnp.where(mask[:, :, None] > 0, y[None], -jnp.inf), axis=1)


if __name__ == "__main__":
    # Small deterministic problem: 8 nodes, input_dim=16, hidden_dim=32, 2 graphs.
    N, INPUT_DIM, HIDDEN_DIM, G = 8, 16, 32, 2

    key = jax.random.PRNGKey(0)
    k_x, k_wl, k_wr, k_bl, k_w1, k_b1, k_w2, k_b2 = jax.random.split(key, 8)

    x = jax.random.normal(k_x, (N, INPUT_DIM), jnp.float32)
    edge_index = jnp.array(
        [[0, 1, 2, 3, 1, 4, 5, 6, 7, 5],     # sources
         [1, 0, 3, 2, 2, 5, 4, 7, 6, 6]],    # destinations
        dtype=jnp.int32)
    batch = jnp.array([0, 0, 0, 0, 1, 1, 1, 1], dtype=jnp.int32)

    adj_cnt, deg_inv = build_aggregation(edge_index, N)
    mask = build_pool_mask(batch, G)

    # Parameters (deterministic init). PyTorch Linear stores [out, in]; we store [in, out].
    wl = 0.1 * jax.random.normal(k_wl, (INPUT_DIM, 128), jnp.float32)
    bl = 0.1 * jax.random.normal(k_bl, (1, 128), jnp.float32)
    wr = 0.1 * jax.random.normal(k_wr, (INPUT_DIM, 128), jnp.float32)
    w1 = 0.1 * jax.random.normal(k_w1, (128, 512), jnp.float32)
    b1 = 0.1 * jax.random.normal(k_b1, (1, 512), jnp.float32)
    w2 = 0.1 * jax.random.normal(k_w2, (512, HIDDEN_DIM), jnp.float32)
    b2 = 0.1 * jax.random.normal(k_b2, (1, HIDDEN_DIM), jnp.float32)

    out = gnn_forward(adj_cnt, deg_inv, x, wl, bl, wr, w1, b1, w2, b2, mask)
    out = jax.block_until_ready(out)
    ref = reference_forward(adj_cnt, deg_inv, x, wl, bl, wr, w1, b1, w2, b2, mask)
    # bf16 MXU matmuls vs f32 reference -> relaxed tolerance.
    np.testing.assert_allclose(np.asarray(out), np.asarray(ref), rtol=2e-2, atol=2e-2)
    assert out.shape == (G, HIDDEN_DIM)

    # Larger check: 2x2 (row-tile, K-tile) grid, cross-tile pooling, and empty off-diagonal
    # adjacency blocks (exercises the block-sparse skip + DMA-remap path).
    N2, G2 = 200, 3
    x2 = jax.random.normal(jax.random.PRNGKey(1), (N2, INPUT_DIM), jnp.float32)
    sizes = [128, 40, 32]                              # graph 0 aligns with the 128-row tile
    batch2 = jnp.asarray(np.repeat(np.arange(G2), sizes), jnp.int32)
    src_l, dst_l, start = [], [], 0
    for s in sizes:                                    # ring graph inside each segment
        idx = np.arange(start, start + s)
        src_l.append(idx)
        dst_l.append(np.roll(idx, -1))
        start += s
    s2 = np.concatenate(src_l)
    d2 = np.concatenate(dst_l)
    edge_index2 = jnp.asarray(
        np.stack([np.concatenate([s2, d2]), np.concatenate([d2, s2])]), jnp.int32)
    adj_cnt2, deg_inv2 = build_aggregation(edge_index2, N2)
    mask2 = build_pool_mask(batch2, G2)

    out2 = gnn_forward(adj_cnt2, deg_inv2, x2, wl, bl, wr, w1, b1, w2, b2, mask2)
    out2 = jax.block_until_ready(out2)
    ref2 = reference_forward(adj_cnt2, deg_inv2, x2, wl, bl, wr, w1, b1, w2, b2, mask2)
    np.testing.assert_allclose(np.asarray(out2), np.asarray(ref2), rtol=2e-2, atol=2e-2)
    assert out2.shape == (G2, HIDDEN_DIM)

    print("KERNEL_OK")
</pallas_src>

<mosaic_0001>
module attributes {stable_mosaic.version = 11 : i64} {
  func.func @gnn_kernel(%arg0: i32, %arg1: i32, %arg2: memref<1x1xi32, #tpu.memory_space<smem>>, %arg3: memref<1x1xi32, #tpu.memory_space<smem>>, %arg4: memref<128x128xi8, #tpu.memory_space<vmem>>, %arg5: memref<128x1xf32, #tpu.memory_space<vmem>>, %arg6: memref<128x128xbf16, #tpu.memory_space<vmem>>, %arg7: memref<128x128xbf16, #tpu.memory_space<vmem>>, %arg8: memref<128x128xbf16, #tpu.memory_space<vmem>>, %arg9: memref<128x128xbf16, #tpu.memory_space<vmem>>, %arg10: memref<1x128xf32, #tpu.memory_space<vmem>>, %arg11: memref<128x512xbf16, #tpu.memory_space<vmem>>, %arg12: memref<1x512xf32, #tpu.memory_space<vmem>>, %arg13: memref<512x128xbf16, #tpu.memory_space<vmem>>, %arg14: memref<1x128xf32, #tpu.memory_space<vmem>>, %arg15: memref<128x2xf32, #tpu.memory_space<vmem>>, %arg16: memref<1x2x128xf32, #tpu.memory_space<vmem>>, %arg17: memref<128x128xf32, #tpu.memory_space<vmem>>) attributes {dimension_semantics = [#tpu.dimension_semantics<parallel>, #tpu.dimension_semantics<arbitrary>], iteration_bounds = array<i64: 1, 1>, scalar_prefetch = 2 : i64, scratch_operands = 1 : i64, tpu.core_type = #tpu.core_type<tc>, window_params = [{transform_indices = @transform_0, window_bounds = array<i64: 128, 128>}, {transform_indices = @transform_1, window_bounds = array<i64: 128, 1>}, {pipeline_mode = #tpu.pipeline_mode<synchronous>, transform_indices = @transform_2, window_bounds = array<i64: 128, 128>}, {transform_indices = @transform_3, window_bounds = array<i64: 128, 128>}, {pipeline_mode = #tpu.pipeline_mode<synchronous>, transform_indices = @transform_4, window_bounds = array<i64: 128, 128>}, {pipeline_mode = #tpu.pipeline_mode<synchronous>, transform_indices = @transform_5, window_bounds = array<i64: 128, 128>}, {pipeline_mode = #tpu.pipeline_mode<synchronous>, transform_indices = @transform_6, window_bounds = array<i64: 1, 128>}, {pipeline_mode = #tpu.pipeline_mode<synchronous>, transform_indices = @transform_7, window_bounds = array<i64: 128, 512>}, {pipeline_mode = #tpu.pipeline_mode<synchronous>, transform_indices = @transform_8, window_bounds = array<i64: 1, 512>}, {pipeline_mode = #tpu.pipeline_mode<synchronous>, transform_indices = @transform_9, window_bounds = array<i64: 512, 128>}, {pipeline_mode = #tpu.pipeline_mode<synchronous>, transform_indices = @transform_10, window_bounds = array<i64: 1, 128>}, {transform_indices = @transform_11, window_bounds = array<i64: 128, 2>}, {transform_indices = @transform_12, window_bounds = array<i64: 1, 2, 128>}]} {
    %c0_i32 = arith.constant 0 : i32
    %0 = arith.cmpi eq, %arg1, %c0_i32 : i32
    %1 = arith.extui %0 : i1 to i32
    %c0_i32_0 = arith.constant 0 : i32
    %2 = arith.cmpi ne, %1, %c0_i32_0 : i32
    scf.if %2 {
      %cst = arith.constant 0.000000e+00 : f32
      %12 = vector.broadcast %cst : f32 to vector<128x128xf32>
      %c0 = arith.constant 0 : index
      %c0_5 = arith.constant 0 : index
      %13 = vector.load %arg17[%c0, %c0_5] : memref<128x128xf32, #tpu.memory_space<vmem>>, vector<128x128xf32>
      tpu.vector_store %arg17[%c0, %c0_5], %12 {strides = array<i32>} : memref<128x128xf32, #tpu.memory_space<vmem>>, vector<128x128xf32>,
    } else {
    }
    %3 = arith.index_cast %arg0 : i32 to index
    %4 = arith.index_cast %arg1 : i32 to index
    %5 = memref.load %arg2[%3, %4] : memref<1x1xi32, #tpu.memory_space<smem>>
    %c0_i32_1 = arith.constant 0 : i32
    %6 = arith.cmpi sgt, %5, %c0_i32_1 : i32
    %7 = arith.extui %6 : i1 to i32
    %c0_i32_2 = arith.constant 0 : i32
    %8 = arith.cmpi ne, %7, %c0_i32_2 : i32
    scf.if %8 {
      %c0 = arith.constant 0 : index
      %c0_5 = arith.constant 0 : index
      %12 = vector.load %arg4[%c0, %c0_5] : memref<128x128xi8, #tpu.memory_space<vmem>>, vector<128x128xi8>
      %13 = arith.sitofp %12 : vector<128x128xi8> to vector<128x128xbf16>
      %c128_i32 = arith.constant 128 : i32
      %14 = arith.muli %arg1, %c128_i32 : i32
      %15 = tpu.assume_multiple %14, 128 : i32
      %16 = arith.index_cast %15 : i32 to index
      %c0_6 = arith.constant 0 : index
      %17 = vector.load %arg6[%16, %c0_6] : memref<128x128xbf16, #tpu.memory_space<vmem>>, vector<128x128xbf16>
      %c0_7 = arith.constant 0 : index
      %c0_8 = arith.constant 0 : index
      %18 = vector.load %arg17[%c0_7, %c0_8] : memref<128x128xf32, #tpu.memory_space<vmem>>, vector<128x128xf32>
      %cst = arith.constant dense<0.000000e+00> : vector<128x128xf32>
      %19 = tpu.matmul %13, %17, %cst {dimension_numbers = #tpu.dot_dimension_numbers<[1], [0], [0], [1], [0, 0, 1, 1], [], []>} : vector<128x128xbf16>, vector<128x128xbf16>, vector<128x128xf32> -> vector<128x128xf32>
      %20 = arith.addf %18, %19 : vector<128x128xf32>
      %c0_9 = arith.constant 0 : index
      %c0_10 = arith.constant 0 : index
      %21 = vector.load %arg17[%c0_9, %c0_10] : memref<128x128xf32, #tpu.memory_space<vmem>>, vector<128x128xf32>
      tpu.vector_store %arg17[%c0_9, %c0_10], %20 {strides = array<i32>} : memref<128x128xf32, #tpu.memory_space<vmem>>, vector<128x128xf32>,
    } else {
    }
    %c0_i32_3 = arith.constant 0 : i32
    %9 = arith.cmpi eq, %arg1, %c0_i32_3 : i32
    %10 = arith.extui %9 : i1 to i32
    %c0_i32_4 = arith.constant 0 : i32
    %11 = arith.cmpi ne, %10, %c0_i32_4 : i32
    scf.if %11 {
      %c0 = arith.constant 0 : index
      %c0_5 = arith.constant 0 : index
      %12 = vector.load %arg17[%c0, %c0_5] : memref<128x128xf32, #tpu.memory_space<vmem>>, vector<128x128xf32>
      %c0_6 = arith.constant 0 : index
      %c0_7 = arith.constant 0 : index
      %13 = vector.load %arg5[%c0_6, %c0_7] : memref<128x1xf32, #tpu.memory_space<vmem>>, vector<128x1xf32>
      %14 = vector.broadcast %13 : vector<128x1xf32> to vector<128x128xf32>
      %15 = arith.mulf %12, %14 : vector<128x128xf32>
      %16 = arith.truncf %15 : vector<128x128xf32> to vector<128x128xbf16>
      %c0_8 = arith.constant 0 : index
      %c0_9 = arith.constant 0 : index
      %17 = vector.load %arg8[%c0_8, %c0_9] : memref<128x128xbf16, #tpu.memory_space<vmem>>, vector<128x128xbf16>
      %cst = arith.constant dense<0.000000e+00> : vector<128x128xf32>
      %18 = tpu.matmul %16, %17, %cst {dimension_numbers = #tpu.dot_dimension_numbers<[1], [0], [0], [1], [0, 0, 1, 1], [], []>} : vector<128x128xbf16>, vector<128x128xbf16>, vector<128x128xf32> -> vector<128x128xf32>
      %c0_10 = arith.constant 0 : index
      %c0_11 = arith.constant 0 : index
      %19 = vector.load %arg7[%c0_10, %c0_11] : memref<128x128xbf16, #tpu.memory_space<vmem>>, vector<128x128xbf16>
      %c0_12 = arith.constant 0 : index
      %c0_13 = arith.constant 0 : index
      %20 = vector.load %arg9[%c0_12, %c0_13] : memref<128x128xbf16, #tpu.memory_space<vmem>>, vector<128x128xbf16>
      %cst_14 = arith.constant dense<0.000000e+00> : vector<128x128xf32>
      %21 = tpu.matmul %19, %20, %cst_14 {dimension_numbers = #tpu.dot_dimension_numbers<[1], [0], [0], [1], [0, 0, 1, 1], [], []>} : vector<128x128xbf16>, vector<128x128xbf16>, vector<128x128xf32> -> vector<128x128xf32>
      %22 = arith.addf %18, %21 : vector<128x128xf32>
      %c0_15 = arith.constant 0 : index
      %c0_16 = arith.constant 0 : index
      %23 = vector.load %arg10[%c0_15, %c0_16] : memref<1x128xf32, #tpu.memory_space<vmem>>, vector<1x128xf32>
      %24 = vector.broadcast %23 : vector<1x128xf32> to vector<128x128xf32>
      %25 = arith.addf %22, %24 : vector<128x128xf32>
      %cst_17 = arith.constant 0.000000e+00 : f32
      %26 = vector.broadcast %cst_17 : f32 to vector<128x128xf32>
      %27 = arith.maximumf %25, %26 : vector<128x128xf32>
      %28 = arith.truncf %27 : vector<128x128xf32> to vector<128x128xbf16>
      %c0_18 = arith.constant 0 : index
      %c0_19 = arith.constant 0 : index
      %29 = vector.load %arg11[%c0_18, %c0_19] : memref<128x512xbf16, #tpu.memory_space<vmem>>, vector<128x512xbf16>
      %cst_20 = arith.constant dense<0.000000e+00> : vector<128x512xf32>
      %30 = tpu.matmul %28, %29, %cst_20 {dimension_numbers = #tpu.dot_dimension_numbers<[1], [0], [0], [1], [0, 0, 1, 1], [], []>} : vector<128x128xbf16>, vector<128x512xbf16>, vector<128x512xf32> -> vector<128x512xf32>
      %c0_21 = arith.constant 0 : index
      %c0_22 = arith.constant 0 : index
      %31 = vector.load %arg12[%c0_21, %c0_22] : memref<1x512xf32, #tpu.memory_space<vmem>>, vector<1x512xf32>
      %32 = vector.broadcast %31 : vector<1x512xf32> to vector<128x512xf32>
      %33 = arith.addf %30, %32 : vector<128x512xf32>
      %cst_23 = arith.constant 0.000000e+00 : f32
      %34 = vector.broadcast %cst_23 : f32 to vector<128x512xf32>
      %35 = arith.maximumf %33, %34 : vector<128x512xf32>
      %36 = arith.truncf %35 : vector<128x512xf32> to vector<128x512xbf16>
      %c0_24 = arith.constant 0 : index
      %c0_25 = arith.constant 0 : index
      %37 = vector.load %arg13[%c0_24, %c0_25] : memref<512x128xbf16, #tpu.memory_space<vmem>>, vector<512x128xbf16>
      %cst_26 = arith.constant dense<0.000000e+00> : vector<128x128xf32>
      %38 = tpu.matmul %36, %37, %cst_26 {dimension_numbers = #tpu.dot_dimension_numbers<[1], [0], [0], [1], [0, 0, 1, 1], [], []>} : vector<128x512xbf16>, vector<512x128xbf16>, vector<128x128xf32> -> vector<128x128xf32>
      %c0_27 = arith.constant 0 : index
      %c0_28 = arith.constant 0 : index
      %39 = vector.load %arg14[%c0_27, %c0_28] : memref<1x128xf32, #tpu.memory_space<vmem>>, vector<1x128xf32>
      %40 = vector.broadcast %39 : vector<1x128xf32> to vector<128x128xf32>
      %41 = arith.addf %38, %40 : vector<128x128xf32>
      %42 = arith.negf %41 : vector<128x128xf32>
      %43 = math.exp %42 : vector<128x128xf32>
      %cst_29 = arith.constant 1.000000e+00 : f32
      %44 = vector.broadcast %cst_29 : f32 to vector<128x128xf32>
      %45 = arith.addf %44, %43 : vector<128x128xf32>
      %46 = arith.divf %44, %45 : vector<128x128xf32>
      %c0_30 = arith.constant 0 : index
      %c0_31 = arith.constant 0 : index
      %47 = vector.load %arg15[%c0_30, %c0_31] : memref<128x2xf32, #tpu.memory_space<vmem>>, vector<128x2xf32>
      %48 = vector.extract_strided_slice %47 {offsets = [0, 0], sizes = [128, 1], strides = [1, 1]} : vector<128x2xf32> to vector<128x1xf32>
      %49 = vector.broadcast %48 : vector<128x1xf32> to vector<128x128xf32>
      %50 = arith.mulf %46, %49 : vector<128x128xf32>
      %cst_32 = arith.constant dense<0xFF800000> : vector<128xf32>
      %51 = vector.multi_reduction <maximumf>, %50, %cst_32 [0] : vector<128x128xf32> to vector<128xf32>
      %52 = vector.shape_cast %51 : vector<128xf32> to vector<1x128xf32>
      %53 = vector.extract_strided_slice %47 {offsets = [0, 1], sizes = [128, 1], strides = [1, 1]} : vector<128x2xf32> to vector<128x1xf32>
      %54 = vector.broadcast %53 : vector<128x1xf32> to vector<128x128xf32>
      %55 = arith.mulf %46, %54 : vector<128x128xf32>
      %cst_33 = arith.constant dense<0xFF800000> : vector<128xf32>
      %56 = vector.multi_reduction <maximumf>, %55, %cst_33 [0] : vector<128x128xf32> to vector<128xf32>
      %57 = vector.shape_cast %56 : vector<128xf32> to vector<1x128xf32>
      %58 = tpu.concatenate %52, %57 in 0 : vector<1x128xf32>, vector<1x128xf32> -> vector<2x128xf32>
      %c0_34 = arith.constant 0 : index
      %c0_35 = arith.constant 0 : index
      %c0_36 = arith.constant 0 : index
      %59 = vector.load %arg16[%c0_34, %c0_35, %c0_36] : memref<1x2x128xf32, #tpu.memory_space<vmem>>, vector<1x2x128xf32>
      %60 = vector.shape_cast %59 : vector<1x2x128xf32> to vector<2x128xf32>
      %61 = vector.shape_cast %58 : vector<2x128xf32> to vector<1x2x128xf32>
      tpu.vector_store %arg16[%c0_34, %c0_35, %c0_36], %61 {strides = array<i32>} : memref<1x2x128xf32, #tpu.memory_space<vmem>>, vector<1x2x128xf32>,
    } else {
    }
    return
  }
  func.func @transform_0(%arg0: i32, %arg1: i32, %arg2: memref<1x1xi32, #tpu.memory_space<smem>>, %arg3: memref<1x1xi32, #tpu.memory_space<smem>>) -> (i32, i32) {
    %0 = arith.index_cast %arg0 : i32 to index
    %1 = arith.index_cast %arg1 : i32 to index
    %2 = memref.load %arg3[%0, %1] : memref<1x1xi32, #tpu.memory_space<smem>>
    %c0_i32 = arith.constant 0 : i32
    return %arg0, %2 : i32, i32
  }
  func.func @transform_1(%arg0: i32, %arg1: i32, %arg2: memref<1x1xi32, #tpu.memory_space<smem>>, %arg3: memref<1x1xi32, #tpu.memory_space<smem>>) -> (i32, i32) {
    %c0_i32 = arith.constant 0 : i32
    %c0_i32_0 = arith.constant 0 : i32
    return %arg0, %c0_i32 : i32, i32
  }
  func.func @transform_2(%arg0: i32, %arg1: i32, %arg2: memref<1x1xi32, #tpu.memory_space<smem>>, %arg3: memref<1x1xi32, #tpu.memory_space<smem>>) -> (i32, i32) {
    %c0_i32 = arith.constant 0 : i32
    %c0_i32_0 = arith.constant 0 : i32
    %c0_i32_1 = arith.constant 0 : i32
    return %c0_i32, %c0_i32_0 : i32, i32
  }
  func.func @transform_3(%arg0: i32, %arg1: i32, %arg2: memref<1x1xi32, #tpu.memory_space<smem>>, %arg3: memref<1x1xi32, #tpu.memory_space<smem>>) -> (i32, i32) {
    %c0_i32 = arith.constant 0 : i32
    %c0_i32_0 = arith.constant 0 : i32
    return %arg0, %c0_i32 : i32, i32
  }
  func.func @transform_4(%arg0: i32, %arg1: i32, %arg2: memref<1x1xi32, #tpu.memory_space<smem>>, %arg3: memref<1x1xi32, #tpu.memory_space<smem>>) -> (i32, i32) {
    %c0_i32 = arith.constant 0 : i32
    %c0_i32_0 = arith.constant 0 : i32
    %c0_i32_1 = arith.constant 0 : i32
    return %c0_i32, %c0_i32_0 : i32, i32
  }
  func.func @transform_5(%arg0: i32, %arg1: i32, %arg2: memref<1x1xi32, #tpu.memory_space<smem>>, %arg3: memref<1x1xi32, #tpu.memory_space<smem>>) -> (i32, i32) {
    %c0_i32 = arith.constant 0 : i32
    %c0_i32_0 = arith.constant 0 : i32
    %c0_i32_1 = arith.constant 0 : i32
    return %c0_i32, %c0_i32_0 : i32, i32
  }
  func.func @transform_6(%arg0: i32, %arg1: i32, %arg2: memref<1x1xi32, #tpu.memory_space<smem>>, %arg3: memref<1x1xi32, #tpu.memory_space<smem>>) -> (i32, i32) {
    %c0_i32 = arith.constant 0 : i32
    %c0_i32_0 = arith.constant 0 : i32
    %c0_i32_1 = arith.constant 0 : i32
    return %c0_i32, %c0_i32_0 : i32, i32
  }
  func.func @transform_7(%arg0: i32, %arg1: i32, %arg2: memref<1x1xi32, #tpu.memory_space<smem>>, %arg3: memref<1x1xi32, #tpu.memory_space<smem>>) -> (i32, i32) {
    %c0_i32 = arith.constant 0 : i32
    %c0_i32_0 = arith.constant 0 : i32
    %c0_i32_1 = arith.constant 0 : i32
    return %c0_i32, %c0_i32_0 : i32, i32
  }
  func.func @transform_8(%arg0: i32, %arg1: i32, %arg2: memref<1x1xi32, #tpu.memory_space<smem>>, %arg3: memref<1x1xi32, #tpu.memory_space<smem>>) -> (i32, i32) {
    %c0_i32 = arith.constant 0 : i32
    %c0_i32_0 = arith.constant 0 : i32
    %c0_i32_1 = arith.constant 0 : i32
    return %c0_i32, %c0_i32_0 : i32, i32
  }
  func.func @transform_9(%arg0: i32, %arg1: i32, %arg2: memref<1x1xi32, #tpu.memory_space<smem>>, %arg3: memref<1x1xi32, #tpu.memory_space<smem>>) -> (i32, i32) {
    %c0_i32 = arith.constant 0 : i32
    %c0_i32_0 = arith.constant 0 : i32
    %c0_i32_1 = arith.constant 0 : i32
    return %c0_i32, %c0_i32_0 : i32, i32
  }
  func.func @transform_10(%arg0: i32, %arg1: i32, %arg2: memref<1x1xi32, #tpu.memory_space<smem>>, %arg3: memref<1x1xi32, #tpu.memory_space<smem>>) -> (i32, i32) {
    %c0_i32 = arith.constant 0 : i32
    %c0_i32_0 = arith.constant 0 : i32
    %c0_i32_1 = arith.constant 0 : i32
    return %c0_i32, %c0_i32_0 : i32, i32
  }
  func.func @transform_11(%arg0: i32, %arg1: i32, %arg2: memref<1x1xi32, #tpu.memory_space<smem>>, %arg3: memref<1x1xi32, #tpu.memory_space<smem>>) -> (i32, i32) {
    %c0_i32 = arith.constant 0 : i32
    %c0_i32_0 = arith.constant 0 : i32
    return %arg0, %c0_i32 : i32, i32
  }
  func.func @transform_12(%arg0: i32, %arg1: i32, %arg2: memref<1x1xi32, #tpu.memory_space<smem>>, %arg3: memref<1x1xi32, #tpu.memory_space<smem>>) -> (i32, i32, i32) {
    %c0_i32 = arith.constant 0 : i32
    %c0_i32_0 = arith.constant 0 : i32
    %c0_i32_1 = arith.constant 0 : i32
    return %arg0, %c0_i32, %c0_i32_0 : i32, i32, i32
  }
}

</mosaic_0001>

<llo_original>
// kernel: tpu_custom_call.1
$region0: #{tpu_custom_call.1}
  #allocation0 [shape = 'u32[]', space=smem, size = 0x4, offset = 0x4, fixed_abs, tag = 'smem constant byte address 0x4 - core index']
  #allocation1 [shape = 'u32[144,128]{1,0:T(1,128)}', space=vmem, size = 0x12000, scoped, tag = 'internal scratch']
  #allocation2 [shape = 'f32[128,128]{1,0:T(8,128)}', space=vmem, size = 0x10000, scoped, tag = 'scratch operand']
  #allocation3 [shape = 's32[1]{0}', space=sflag, size = 0x4, scoped, tag = 'scoped memory for tpu_custom_call.1']
  #allocation4 [shape = 's32[1,1]{1,0:T(1,128)S(6)}', space=smem, size = 0x200, scoped, tag = 'prefetched SMEM operand 0']
  #allocation5 [shape = 's32[1,1]{1,0:T(1,128)S(6)}', space=smem, size = 0x200, scoped, tag = 'prefetched SMEM operand 1']
  %s0 = inlined_call_operand.<no memory space> [shape: s32[1,1], index: 0, kind: input, shape index: {}]
  %s1 = inlined_call_operand.<no memory space> [shape: s32[1,1], index: 1, kind: input, shape index: {}]
  %s2 = inlined_call_operand.vmem [shape: s8[128,128], index: 2, kind: input, shape index: {}]
  %s3 = inlined_call_operand.vmem [shape: f32[128,1], index: 3, kind: input, shape index: {}]
  %s4 = inlined_call_operand.hbm [shape: bf16[128,128], index: 4, kind: input, shape index: {}]
  %s5 = inlined_call_operand.hbm [shape: bf16[128,128], index: 5, kind: input, shape index: {}]
  %s6 = inlined_call_operand.hbm [shape: bf16[128,128], index: 6, kind: input, shape index: {}]
  %s7 = inlined_call_operand.hbm [shape: bf16[128,128], index: 7, kind: input, shape index: {}]
  %s8 = inlined_call_operand.vmem [shape: f32[1,128], index: 8, kind: input, shape index: {}]
  %s9 = inlined_call_operand.vmem [shape: bf16[128,512], index: 9, kind: input, shape index: {}]
  %s10 = inlined_call_operand.vmem [shape: f32[1,512], index: 10, kind: input, shape index: {}]
  %s11 = inlined_call_operand.hbm [shape: bf16[512,128], index: 11, kind: input, shape index: {}]
  %s12 = inlined_call_operand.vmem [shape: f32[1,128], index: 12, kind: input, shape index: {}]
  %s13 = inlined_call_operand.vmem [shape: f32[128,2], index: 13, kind: input, shape index: {}]
  %s14 = inlined_call_operand.hbm [shape: f32[1,2,128], index: 14, kind: output, shape index: {}]
  %s15 = sld [smem:[#allocation0]]
  $region90: #{tpu_custom_call.1} parent=0
    _
  %s17 = ssub.s32 1, %s15
  %s18 = scalar_select 0, %s17, %s15
  %19 = sst [smem:[#allocation4]] %s0
  %20 = sst [smem:[#allocation5]] %s1
  $region1: #{tpu_custom_call.1} parent=0
    #allocation6 [shape = 'u8[32768]{0}', space=vmem, size = 0x8000, scoped, tag = 'input window, operand 4, single buffered']
    #allocation7 [shape = 's32[1]{0}', space=sflag, size = 0x4, scoped, tag = 'scoped memory for tpu_custom_call.1']
    #allocation8 [shape = 's32[1]{0}', space=sflag, size = 0x4, scoped, tag = 'scoped memory for tpu_custom_call.1']
    #allocation9 [shape = 'u8[32768]{0}', space=vmem, size = 0x8000, scoped, tag = 'input window, operand 5, single buffered']
    #allocation10 [shape = 's32[1]{0}', space=sflag, size = 0x4, scoped, tag = 'scoped memory for tpu_custom_call.1']
    #allocation11 [shape = 'u8[32768]{0}', space=vmem, size = 0x8000, scoped, tag = 'input window, operand 6, single buffered']
    #allocation12 [shape = 'u8[32768]{0}', space=vmem, size = 0x8000, scoped, tag = 'input window, operand 7, single buffered']
    #allocation13 [shape = 's32[1]{0}', space=sflag, size = 0x4, scoped, tag = 'scoped memory for tpu_custom_call.1']
    #allocation14 [shape = 'u8[131072]{0}', space=vmem, size = 0x20000, scoped, tag = 'input window, operand 11, single buffered']
    #allocation15 [shape = 'u8[1024]{0}', space=vmem, size = 0x400, scoped, tag = 'output window, operand 0, single buffered']
    %21 = vsyncpa [#allocation7], 0
    %22 = vsyncpa [#allocation10], 0
    %23 = vsyncpa [#allocation13], 0
    %24 = vsyncpa [#allocation8], 0
    // Predicated region
    $region2: #{tpu_custom_call.1} parent=1 // pred_check
      _
    $region3: #{tpu_custom_call.1} parent=1 // pred_check_branch
      %26 = sbr.rel (0) target = $region5
    $region4: #{tpu_custom_call.1} parent=1 // pred_region
      %s27 = sadd.s32 0, 0
      %s28 = smul.u32 %s27, 128
      %s29 = sadd.s32 %s28, 0
      %s30 = sld [smem:[#allocation5 + %s29]]
      %p31 = scmp.lt.s32.totalorder %s30, 0
      %s32 = scalar_select %p31, %s30, 0
      %s33 = smul.addr %s32, 8
      %s34 = scalar_lea.vmem %s2, %s33
      %s35 = sadd.s32 0, 0
      %s36 = smul.u32 %s35, 128
      %s37 = sadd.s32 %s36, 0
      %s38 = sld [smem:[#allocation5 + %s37]]
    $region5: #{tpu_custom_call.1} parent=1 // pred_fallthru
      _
    // Predicated region
    $region6: #{tpu_custom_call.1} parent=1 // pred_check
      _
    $region7: #{tpu_custom_call.1} parent=1 // pred_check_branch
      %40 = sbr.rel (0) target = $region9
    $region8: #{tpu_custom_call.1} parent=1 // pred_region
      _
    $region9: #{tpu_custom_call.1} parent=1 // pred_fallthru
      _
    // Predicated region
    $region10: #{tpu_custom_call.1} parent=1 // pred_check
      _
    $region11: #{tpu_custom_call.1} parent=1 // pred_check_branch
      %42 = sbr.rel (0) target = $region13
    $region12: #{tpu_custom_call.1} parent=1 // pred_region
      %s44 = ssub.s32 1024, 1024
      %45 = vsyncadd [#allocation7], %s44
      %s46 = sshll.u32 [#allocation6], 4
      %s47 = int_to_ptr.vmem [resolvable:$true] %s46
      %52 = dma.hbm_to_vmem [thread:$0]  %s4, 1024, %s47, [#allocation7], 64, 64, 4
    $region13: #{tpu_custom_call.1} parent=1 // pred_fallthru
      _
    // Predicated region
    $region14: #{tpu_custom_call.1} parent=1 // pred_check
      _
    $region15: #{tpu_custom_call.1} parent=1 // pred_check_branch
      %54 = sbr.rel (0) target = $region17
    $region16: #{tpu_custom_call.1} parent=1 // pred_region
      %s56 = ssub.s32 1024, 1024
      %57 = vsyncadd [#allocation10], %s56
      %s58 = sshll.u32 [#allocation9], 4
      %s59 = int_to_ptr.vmem [resolvable:$true] %s58
      %64 = dma.hbm_to_vmem [thread:$0]  %s5, 1024, %s59, [#allocation10], 64, 64, 4
    $region17: #{tpu_custom_call.1} parent=1 // pred_fallthru
      _
    // Predicated region
    $region18: #{tpu_custom_call.1} parent=1 // pred_check
      _
    $region19: #{tpu_custom_call.1} parent=1 // pred_check_branch
      %66 = sbr.rel (0) target = $region21
    $region20: #{tpu_custom_call.1} parent=1 // pred_region
      %s68 = ssub.s32 1024, 1024
      %69 = vsyncadd [#allocation10], %s68
      %s70 = sshll.u32 [#allocation11], 4
      %s71 = int_to_ptr.vmem [resolvable:$true] %s70
      %76 = dma.hbm_to_vmem [thread:$0]  %s6, 1024, %s71, [#allocation10], 64, 64, 4
    $region21: #{tpu_custom_call.1} parent=1 // pred_fallthru
      _
    // Predicated region
    $region22: #{tpu_custom_call.1} parent=1 // pred_check
      _
    $region23: #{tpu_custom_call.1} parent=1 // pred_check_branch
      %78 = sbr.rel (0) target = $region25
    $region24: #{tpu_custom_call.1} parent=1 // pred_region
      %s80 = ssub.s32 1024, 1024
      %81 = vsyncadd [#allocation13], %s80
      %s82 = sshll.u32 [#allocation12], 4
      %s83 = int_to_ptr.vmem [resolvable:$true] %s82
      %88 = dma.hbm_to_vmem [thread:$0]  %s7, 1024, %s83, [#allocation13], 64, 64, 4
    $region25: #{tpu_custom_call.1} parent=1 // pred_fallthru
      _
    // Predicated region
    $region26: #{tpu_custom_call.1} parent=1 // pred_check
      _
    $region27: #{tpu_custom_call.1} parent=1 // pred_check_branch
      %90 = sbr.rel (0) target = $region29
    $region28: #{tpu_custom_call.1} parent=1 // pred_region
      _
    $region29: #{tpu_custom_call.1} parent=1 // pred_fallthru
      _
    // Predicated region
    $region30: #{tpu_custom_call.1} parent=1 // pred_check
      _
    $region31: #{tpu_custom_call.1} parent=1 // pred_check_branch
      %92 = sbr.rel (0) target = $region33
    $region32: #{tpu_custom_call.1} parent=1 // pred_region
      _
    $region33: #{tpu_custom_call.1} parent=1 // pred_fallthru
      _
    // Predicated region
    $region34: #{tpu_custom_call.1} parent=1 // pred_check
      _
    $region35: #{tpu_custom_call.1} parent=1 // pred_check_branch
      %94 = sbr.rel (0) target = $region37
    $region36: #{tpu_custom_call.1} parent=1 // pred_region
      _
    $region37: #{tpu_custom_call.1} parent=1 // pred_fallthru
      _
    // Predicated region
    $region38: #{tpu_custom_call.1} parent=1 // pred_check
      _
    $region39: #{tpu_custom_call.1} parent=1 // pred_check_branch
      %96 = sbr.rel (0) target = $region41
    $region40: #{tpu_custom_call.1} parent=1 // pred_region
      %s98 = ssub.s32 4096, 4096
      %99 = vsyncadd [#allocation13], %s98
      %s100 = sshll.u32 [#allocation14], 4
      %s101 = int_to_ptr.vmem [resolvable:$true] %s100
      %106 = dma.hbm_to_vmem [thread:$0]  %s11, 4096, %s101, [#allocation13], 64, 64, 4
    $region41: #{tpu_custom_call.1} parent=1 // pred_fallthru
      _
    // Predicated region
    $region42: #{tpu_custom_call.1} parent=1 // pred_check
      _
    $region43: #{tpu_custom_call.1} parent=1 // pred_check_branch
      %108 = sbr.rel (0) target = $region45
    $region44: #{tpu_custom_call.1} parent=1 // pred_region
      _
    $region45: #{tpu_custom_call.1} parent=1 // pred_fallthru
      _
    // Predicated region
    $region46: #{tpu_custom_call.1} parent=1 // pred_check
      _
    $region47: #{tpu_custom_call.1} parent=1 // pred_check_branch
      %110 = sbr.rel (0) target = $region49
    $region48: #{tpu_custom_call.1} parent=1 // pred_region
      _
    $region49: #{tpu_custom_call.1} parent=1 // pred_fallthru
      _
    // Predicated region
    $region50: #{tpu_custom_call.1} parent=1 // pred_check
      _
    $region51: #{tpu_custom_call.1} parent=1 // pred_check_branch
      %112 = sbr.rel (0) target = $region53
    $region52: #{tpu_custom_call.1} parent=1 // pred_region
      %113 = dma.done [#allocation7], 1024
    $region53: #{tpu_custom_call.1} parent=1 // pred_fallthru
      _
    // Predicated region
    $region54: #{tpu_custom_call.1} parent=1 // pred_check
      _
    $region55: #{tpu_custom_call.1} parent=1 // pred_check_branch
      %115 = sbr.rel (0) target = $region57
    $region56: #{tpu_custom_call.1} parent=1 // pred_region
      %116 = dma.done [#allocation10], 1024
    $region57: #{tpu_custom_call.1} parent=1 // pred_fallthru
      _
    // Predicated region
    $region58: #{tpu_custom_call.1} parent=1 // pred_check
      _
    $region59: #{tpu_custom_call.1} parent=1 // pred_check_branch
      %118 = sbr.rel (0) target = $region61
    $region60: #{tpu_custom_call.1} parent=1 // pred_region
      %119 = dma.done [#allocation10], 1024
    $region61: #{tpu_custom_call.1} parent=1 // pred_fallthru
      _
    // Predicated region
    $region62: #{tpu_custom_call.1} parent=1 // pred_check
      _
    $region63: #{tpu_custom_call.1} parent=1 // pred_check_branch
      %121 = sbr.rel (0) target = $region65
    $region64: #{tpu_custom_call.1} parent=1 // pred_region
      %122 = dma.done [#allocation13], 1024
    $region65: #{tpu_custom_call.1} parent=1 // pred_fallthru
      _
    // Predicated region
    $region66: #{tpu_custom_call.1} parent=1 // pred_check
      _
    $region67: #{tpu_custom_call.1} parent=1 // pred_check_branch
      %124 = sbr.rel (0) target = $region69
    $region68: #{tpu_custom_call.1} parent=1 // pred_region
      %125 = dma.done [#allocation13], 4096
    $region69: #{tpu_custom_call.1} parent=1 // pred_fallthru
      _
    %s126 = sadd.s32 0, 0
    %s127 = smul.u32 %s126, 128
    %s128 = sadd.s32 %s127, 0
    %s129 = sld [smem:[#allocation5 + %s128]]
    %p130 = scmp.lt.s32.totalorder %s129, 0
    %s131 = scalar_select %p130, %s129, 0
    %s132 = smul.addr %s131, 8
    %s133 = scalar_lea.vmem %s2, %s132
    %s134 = sadd.s32 0, 0
    %s135 = smul.u32 %s134, 128
    %s136 = sadd.s32 %s135, 0
    %s137 = sld [smem:[#allocation5 + %s136]]
    %p138 = scmp.lt.s32.totalorder %s137, 0
    %s139 = scalar_select %p138, %s137, 0
    %s140 = smul.addr %s139, 8
    %s141 = scalar_lea.vmem %s2, %s140
    %s142 = sadd.s32 0, 0
    %s143 = smul.u32 %s142, 128
    %s144 = sadd.s32 %s143, 0
    %s145 = sld [smem:[#allocation5 + %s144]]
    %p147 = scmp.eq.s32.totalorder 0, 0
    // Predicated region
    $region70: #{tpu_custom_call.1} parent=1 // pred_check
      %p148 = pneg %p147
    $region71: #{tpu_custom_call.1} parent=1 // pred_check_branch
      %150 = sbr.rel (%p148) target = $region73
    $region72: #{tpu_custom_call.1} parent=1 // pred_region
      %151 = vst [vmem:[#allocation2] sm:$0xff] 0.0
      %152 = vst [vmem:[#allocation2 + $0x8] sm:$0xff] 0.0
      %153 = vst [vmem:[#allocation2 + $0x10] sm:$0xff] 0.0
      %154 = vst [vmem:[#allocation2 + $0x18] sm:$0xff] 0.0
      %155 = vst [vmem:[#allocation2 + $0x20] sm:$0xff] 0.0
      %156 = vst [vmem:[#allocation2 + $0x28] sm:$0xff] 0.0
      %157 = vst [vmem:[#allocation2 + $0x30] sm:$0xff] 0.0
      %158 = vst [vmem:[#allocation2 + $0x38] sm:$0xff] 0.0
      %159 = vst [vmem:[#allocation2 + $0x40] sm:$0xff] 0.0
      %160 = vst [vmem:[#allocation2 + $0x48] sm:$0xff] 0.0
      %161 = vst [vmem:[#allocation2 + $0x50] sm:$0xff] 0.0
      %162 = vst [vmem:[#allocation2 + $0x58] sm:$0xff] 0.0
      %163 = vst [vmem:[#allocation2 + $0x60] sm:$0xff] 0.0
      %164 = vst [vmem:[#allocation2 + $0x68] sm:$0xff] 0.0
      %165 = vst [vmem:[#allocation2 + $0x70] sm:$0xff] 0.0
      %166 = vst [vmem:[#allocation2 + $0x78] sm:$0xff] 0.0
    $region73: #{tpu_custom_call.1} parent=1 // pred_fallthru
      _
    %s167 = sadd.s32 0, 0
    %s168 = smul.u32 %s167, 128
    %s169 = sadd.s32 %s168, 0
    %s170 = sld [smem:[#allocation4 + %s169]]
    %p171 = scmp.gt.s32.totalorder %s170, 0
    // Predicated region
    $region74: #{tpu_custom_call.1} parent=1 // pred_check
      %p172 = pneg %p171
    $region75: #{tpu_custom_call.1} parent=1 // pred_check_branch
      %174 = sbr.rel (%p172) target = $region77
    $region76: #{tpu_custom_call.1} parent=1 // pred_region
      %v175 = vld [vmem:[%s141] sm:$0xff]
      %v176 = vld [vmem:[%s141 + $0x8] sm:$0xff]
      %v177 = vld [vmem:[%s141 + $0x10] sm:$0xff]
      %v178 = vld [vmem:[%s141 + $0x18] sm:$0xff]
      %v179 = vunpack.c.l.s8.bf16 %v175
      %v180 = vunpack.c.h.s8.bf16 %v175
      %v181 = vunpack.c.l.s8.bf16 %v176
      %v182 = vunpack.c.h.s8.bf16 %v176
      %v183 = vunpack.c.l.s8.bf16 %v177
      %v184 = vunpack.c.h.s8.bf16 %v177
      %v185 = vunpack.c.l.s8.bf16 %v178
      %v186 = vunpack.c.h.s8.bf16 %v178
      %s187 = smul.u32 0, 128
      %s188 = sshra.s32 %s187, 3
      %s189 = sand.u32 %s187, 7
      %s190 = smul.addr %s188, 4
      %s191 = scalar_lea.vmem [#allocation6], %s190
      %v192 = vld [vmem:[%s191] sm:$0xf]
      %v193 = vld [vmem:[%s191 + $0x4] sm:$0xf]
      %v194 = vld [vmem:[%s191 + $0x8] sm:$0xf]
      %v195 = vld [vmem:[%s191 + $0xc] sm:$0xf]
      %v196 = vld [vmem:[%s191 + $0x10] sm:$0xf]
      %v197 = vld [vmem:[%s191 + $0x14] sm:$0xf]
      %v198 = vld [vmem:[%s191 + $0x18] sm:$0xf]
      %v199 = vld [vmem:[%s191 + $0x1c] sm:$0xf]
      %v200 = vld [vmem:[%s191 + $0x20] sm:$0xf]
      %v201 = vld [vmem:[%s191 + $0x24] sm:$0xf]
      %v202 = vld [vmem:[%s191 + $0x28] sm:$0xf]
      %v203 = vld [vmem:[%s191 + $0x2c] sm:$0xf]
      %v204 = vld [vmem:[%s191 + $0x30] sm:$0xf]
      %v205 = vld [vmem:[%s191 + $0x34] sm:$0xf]
      %v206 = vld [vmem:[%s191 + $0x38] sm:$0xf]
      %v207 = vld [vmem:[%s191 + $0x3c] sm:$0xf]
      %v208 = vld [vmem:[#allocation2] sm:$0xff]
      %v209 = vld [vmem:[#allocation2 + $0x8] sm:$0xff]
      %v210 = vld [vmem:[#allocation2 + $0x10] sm:$0xff]
      %v211 = vld [vmem:[#allocation2 + $0x18] sm:$0xff]
      %v212 = vld [vmem:[#allocation2 + $0x20] sm:$0xff]
      %v213 = vld [vmem:[#allocation2 + $0x28] sm:$0xff]
      %v214 = vld [vmem:[#allocation2 + $0x30] sm:$0xff]
      %v215 = vld [vmem:[#allocation2 + $0x38] sm:$0xff]
      %v216 = vld [vmem:[#allocation2 + $0x40] sm:$0xff]
      %v217 = vld [vmem:[#allocation2 + $0x48] sm:$0xff]
      %v218 = vld [vmem:[#allocation2 + $0x50] sm:$0xff]
      %v219 = vld [vmem:[#allocation2 + $0x58] sm:$0xff]
      %v220 = vld [vmem:[#allocation2 + $0x60] sm:$0xff]
      %v221 = vld [vmem:[#allocation2 + $0x68] sm:$0xff]
      %v222 = vld [vmem:[#allocation2 + $0x70] sm:$0xff]
      %v223 = vld [vmem:[#allocation2 + $0x78] sm:$0xff]
      %v240 = vunpack.c.l.b16 %v192
      %v241 = vunpack.c.l.b16 %v193
      %v242 = vunpack.c.l.b16 %v194
      %v243 = vunpack.c.l.b16 %v195
      %v244 = vunpack.c.l.b16 %v196
      %v245 = vunpack.c.l.b16 %v197
      %v246 = vunpack.c.l.b16 %v198
      %v247 = vunpack.c.l.b16 %v199
      %v248 = vunpack.c.l.b16 %v200
      %v249 = vunpack.c.l.b16 %v201
      %v250 = vunpack.c.l.b16 %v202
      %v251 = vunpack.c.l.b16 %v203
      %v252 = vunpack.c.l.b16 %v204
      %v253 = vunpack.c.l.b16 %v205
      %v254 = vunpack.c.l.b16 %v206
      %v255 = vunpack.c.l.b16 %v207
      %v256 = vpack.c.b16 %v241, %v240
      %v257 = vpack.c.b16 %v243, %v242
      %v258 = vpack.c.b16 %v245, %v244
      %v259 = vpack.c.b16 %v247, %v246
      %v260 = vpack.c.b16 %v249, %v248
      %v261 = vpack.c.b16 %v251, %v250
      %v262 = vpack.c.b16 %v253, %v252
      %v263 = vpack.c.b16 %v255, %v254
      %272 = vmatprep.subr.bf16.mxu0 0
      %273 = vmatpush1.bf16.msra.mxu0 %v256
      %274 = vmatprep.subr.bf16.mxu0 0
      %275 = vmatpush1.bf16.msra.mxu0 %v257
      %276 = vmatprep.subr.bf16.mxu0 0
      %277 = vmatpush1.bf16.msra.mxu0 %v258
      %278 = vmatprep.subr.bf16.mxu0 0
      %279 = vmatpush1.bf16.msra.mxu0 %v259
      %280 = vmatprep.subr.bf16.mxu0 0
      %281 = vmatpush1.bf16.msra.mxu0 %v260
      %282 = vmatprep.subr.bf16.mxu0 0
      %283 = vmatpush1.bf16.msra.mxu0 %v261
      %284 = vmatprep.subr.bf16.mxu0 0
      %285 = vmatpush1.bf16.msra.mxu0 %v262
      %286 = vmatprep.subr.bf16.mxu0 0
      %287 = vmatpush1.bf16.msra.mxu0 %v263
      %288 = vmatprep.subr.bf16.mxu0 0
      %289 = vmatpush1.bf16.msra.mxu0 0
      %290 = vmatprep.subr.bf16.mxu0 0
      %291 = vmatpush1.bf16.msra.mxu0 0
      %292 = vmatprep.subr.bf16.mxu0 0
      %293 = vmatpush1.bf16.msra.mxu0 0
      %294 = vmatprep.subr.bf16.mxu0 0
      %295 = vmatpush1.bf16.msra.mxu0 0
      %296 = vmatprep.subr.bf16.mxu0 0
      %297 = vmatpush1.bf16.msra.mxu0 0
      %298 = vmatprep.subr.bf16.mxu0 0
      %299 = vmatpush1.bf16.msra.mxu0 0
      %300 = vmatprep.subr.bf16.mxu0 0
      %301 = vmatpush1.bf16.msra.mxu0 0
      %302 = vmatprep.subr.bf16.mxu0 0
      %303 = vmatpush1.bf16.msra.mxu0 0
      %304 = vmatprep.mubr.bf16.mxu0 0
      %305 = vmatmul.mubr.bf16.gmra.mrb[0].mxu0 %v179
      %v306 = vpop.f32.mrb[0].mxu0
      %v307 = vadd.f32 0.0, %v306
      %v308 = vpop.f32.mrb[0].mxu0
      %v309 = vpop.f32.mrb[0].mxu0
      %v310 = vadd.f32 0.0, %v309
      %v311 = vpop.f32.mrb[0].mxu0
      %312 = vmatprep.mubr.bf16.mxu0 0
      %313 = vmatmul.mubr.bf16.gmra.mrb[0].mxu0 %v180
      %v314 = vpop.f32.mrb[0].mxu0
      %v315 = vadd.f32 0.0, %v314
      %v316 = vpop.f32.mrb[0].mxu0
      %v317 = vpop.f32.mrb[0].mxu0
      %v318 = vadd.f32 0.0, %v317
      %v319 = vpop.f32.mrb[0].mxu0
      %320 = vmatprep.mubr.bf16.mxu0 0
      %321 = vmatmul.mubr.bf16.gmra.mrb[0].mxu0 %v181
      %v322 = vpop.f32.mrb[0].mxu0
      %v323 = vadd.f32 0.0, %v322
      %v324 = vpop.f32.mrb[0].mxu0
      %v325 = vpop.f32.mrb[0].mxu0
      %v326 = vadd.f32 0.0, %v325
      %v327 = vpop.f32.mrb[0].mxu0
      %328 = vmatprep.mubr.bf16.mxu0 0
      %329 = vmatmul.mubr.bf16.gmra.mrb[0].mxu0 %v182
      %v330 = vpop.f32.mrb[0].mxu0
      %v331 = vadd.f32 0.0, %v330
      %v332 = vpop.f32.mrb[0].mxu0
      %v333 = vpop.f32.mrb[0].mxu0
      %v334 = vadd.f32 0.0, %v333
      %v335 = vpop.f32.mrb[0].mxu0
      %336 = vmatprep.mubr.bf16.mxu0 0
      %337 = vmatmul.mubr.bf16.gmra.mrb[0].mxu0 %v183
      %v338 = vpop.f32.mrb[0].mxu0
      %v339 = vadd.f32 0.0, %v338
      %v340 = vpop.f32.mrb[0].mxu0
      %v341 = vpop.f32.mrb[0].mxu0
      %v342 = vadd.f32 0.0, %v341
      %v343 = vpop.f32.mrb[0].mxu0
      %344 = vmatprep.mubr.bf16.mxu0 0
      %345 = vmatmul.mubr.bf16.gmra.mrb[0].mxu0 %v184
      %v346 = vpop.f32.mrb[0].mxu0
      %v347 = vadd.f32 0.0, %v346
      %v348 = vpop.f32.mrb[0].mxu0
      %v349 = vpop.f32.mrb[0].mxu0
      %v350 = vadd.f32 0.0, %v349
      %v351 = vpop.f32.mrb[0].mxu0
      %352 = vmatprep.mubr.bf16.mxu0 0
      %353 = vmatmul.mubr.bf16.gmra.mrb[0].mxu0 %v185
      %v354 = vpop.f32.mrb[0].mxu0
      %v355 = vadd.f32 0.0, %v354
      %v356 = vpop.f32.mrb[0].mxu0
      %v357 = vpop.f32.mrb[0].mxu0
      %v358 = vadd.f32 0.0, %v357
      %v359 = vpop.f32.mrb[0].mxu0
      %360 = vmatprep.mubr.bf16.mxu0 0
      %361 = vmatmul.mubr.bf16.gmra.mrb[0].mxu0 %v186
      %v362 = vpop.f32.mrb[0].mxu0
      %v363 = vadd.f32 0.0, %v362
      %v364 = vpop.f32.mrb[0].mxu0
      %v365 = vpop.f32.mrb[0].mxu0
      %v366 = vadd.f32 0.0, %v365
      %v367 = vpop.f32.mrb[0].mxu0
      %368 = vdwg.mxu0
      %v369 = vadd.f32 %v208, %v307
      %v370 = vadd.f32 %v209, %v310
      %v371 = vadd.f32 %v210, %v315
      %v372 = vadd.f32 %v211, %v318
      %v373 = vadd.f32 %v212, %v323
      %v374 = vadd.f32 %v213, %v326
      %v375 = vadd.f32 %v214, %v331
      %v376 = vadd.f32 %v215, %v334
      %v377 = vadd.f32 %v216, %v339
      %v378 = vadd.f32 %v217, %v342
      %v379 = vadd.f32 %v218, %v347
      %v380 = vadd.f32 %v219, %v350
      %v381 = vadd.f32 %v220, %v355
      %v382 = vadd.f32 %v221, %v358
      %v383 = vadd.f32 %v222, %v363
      %v384 = vadd.f32 %v223, %v366
      %385 = vst [vmem:[#allocation2] sm:$0xff] %v369
      %386 = vst [vmem:[#allocation2 + $0x8] sm:$0xff] %v370
      %387 = vst [vmem:[#allocation2 + $0x10] sm:$0xff] %v371
      %388 = vst [vmem:[#allocation2 + $0x18] sm:$0xff] %v372
      %389 = vst [vmem:[#allocation2 + $0x20] sm:$0xff] %v373
      %390 = vst [vmem:[#allocation2 + $0x28] sm:$0xff] %v374
      %391 = vst [vmem:[#allocation2 + $0x30] sm:$0xff] %v375
      %392 = vst [vmem:[#allocation2 + $0x38] sm:$0xff] %v376
      %393 = vst [vmem:[#allocation2 + $0x40] sm:$0xff] %v377
      %394 = vst [vmem:[#allocation2 + $0x48] sm:$0xff] %v378
      %395 = vst [vmem:[#allocation2 + $0x50] sm:$0xff] %v379
      %396 = vst [vmem:[#allocation2 + $0x58] sm:$0xff] %v380
      %397 = vst [vmem:[#allocation2 + $0x60] sm:$0xff] %v381
      %398 = vst [vmem:[#allocation2 + $0x68] sm:$0xff] %v382
      %399 = vst [vmem:[#allocation2 + $0x70] sm:$0xff] %v383
      %400 = vst [vmem:[#allocation2 + $0x78] sm:$0xff] %v384
    $region77: #{tpu_custom_call.1} parent=1 // pred_fallthru
      _
    // Predicated region
    $region78: #{tpu_custom_call.1} parent=1 // pred_check
      %p401 = pneg %p147
    $region79: #{tpu_custom_call.1} parent=1 // pred_check_branch
      %403 = sbr.rel (%p401) target = $region81
    $region80: #{tpu_custom_call.1} parent=1 // pred_region
      %v404 = vld [vmem:[#allocation2] sm:$0xff]
      %v405 = vld [vmem:[#allocation2 + $0x8] sm:$0xff]
      %v406 = vld [vmem:[#allocation2 + $0x10] sm:$0xff]
      %v407 = vld [vmem:[#allocation2 + $0x18] sm:$0xff]
      %v408 = vld [vmem:[#allocation2 + $0x20] sm:$0xff]
      %v409 = vld [vmem:[#allocation2 + $0x28] sm:$0xff]
      %v410 = vld [vmem:[#allocation2 + $0x30] sm:$0xff]
      %v411 = vld [vmem:[#allocation2 + $0x38] sm:$0xff]
      %v412 = vld [vmem:[#allocation2 + $0x40] sm:$0xff]
      %v413 = vld [vmem:[#allocation2 + $0x48] sm:$0xff]
      %v414 = vld [vmem:[#allocation2 + $0x50] sm:$0xff]
      %v415 = vld [vmem:[#allocation2 + $0x58] sm:$0xff]
      %v416 = vld [vmem:[#allocation2 + $0x60] sm:$0xff]
      %v417 = vld [vmem:[#allocation2 + $0x68] sm:$0xff]
      %v418 = vld [vmem:[#allocation2 + $0x70] sm:$0xff]
      %v419 = vld [vmem:[#allocation2 + $0x78] sm:$0xff]
      %v420 = vld [vmem:[%s3] sm:$0xff]
      %v421 = vld [vmem:[%s3 + $0x8] sm:$0xff]
      %v422 = vld [vmem:[%s3 + $0x10] sm:$0xff]
      %v423 = vld [vmem:[%s3 + $0x18] sm:$0xff]
      %v424 = vld [vmem:[%s3 + $0x20] sm:$0xff]
      %v425 = vld [vmem:[%s3 + $0x28] sm:$0xff]
      %v426 = vld [vmem:[%s3 + $0x30] sm:$0xff]
      %v427 = vld [vmem:[%s3 + $0x38] sm:$0xff]
      %v428 = vld [vmem:[%s3 + $0x40] sm:$0xff]
      %v429 = vld [vmem:[%s3 + $0x48] sm:$0xff]
      %v430 = vld [vmem:[%s3 + $0x50] sm:$0xff]
      %v431 = vld [vmem:[%s3 + $0x58] sm:$0xff]
      %v432 = vld [vmem:[%s3 + $0x60] sm:$0xff]
      %v433 = vld [vmem:[%s3 + $0x68] sm:$0xff]
      %v434 = vld [vmem:[%s3 + $0x70] sm:$0xff]
      %v435 = vld [vmem:[%s3 + $0x78] sm:$0xff]
      %437 = vset.pattern.permute.xlu0 0
      %438 = vperm.xlu0 %437, %v420
      %v439 = vpop.permute.xlu0 %438
      %442 = vset.pattern.permute.xlu0 0
      %443 = vperm.xlu0 %442, %v421
      %v444 = vpop.permute.xlu0 %443
      %447 = vset.pattern.permute.xlu0 0
      %448 = vperm.xlu0 %447, %v422
      %v449 = vpop.permute.xlu0 %448
      %452 = vset.pattern.permute.xlu0 0
      %453 = vperm.xlu0 %452, %v423
      %v454 = vpop.permute.xlu0 %453
      %457 = vset.pattern.permute.xlu0 0
      %458 = vperm.xlu0 %457, %v424
      %v459 = vpop.permute.xlu0 %458
      %462 = vset.pattern.permute.xlu0 0
      %463 = vperm.xlu0 %462, %v425
      %v464 = vpop.permute.xlu0 %463
      %467 = vset.pattern.permute.xlu0 0
      %468 = vperm.xlu0 %467, %v426
      %v469 = vpop.permute.xlu0 %468
      %472 = vset.pattern.permute.xlu0 0
      %473 = vperm.xlu0 %472, %v427
      %v474 = vpop.permute.xlu0 %473
      %477 = vset.pattern.permute.xlu0 0
      %478 = vperm.xlu0 %477, %v428
      %v479 = vpop.permute.xlu0 %478
      %482 = vset.pattern.permute.xlu0 0
      %483 = vperm.xlu0 %482, %v429
      %v484 = vpop.permute.xlu0 %483
      %487 = vset.pattern.permute.xlu0 0
      %488 = vperm.xlu0 %487, %v430
      %v489 = vpop.permute.xlu0 %488
      %492 = vset.pattern.permute.xlu0 0
      %493 = vperm.xlu0 %492, %v431
      %v494 = vpop.permute.xlu0 %493
      %497 = vset.pattern.permute.xlu0 0
      %498 = vperm.xlu0 %497, %v432
      %v499 = vpop.permute.xlu0 %498
      %502 = vset.pattern.permute.xlu0 0
      %503 = vperm.xlu0 %502, %v433
      %v504 = vpop.permute.xlu0 %503
      %507 = vset.pattern.permute.xlu0 0
      %508 = vperm.xlu0 %507, %v434
      %v509 = vpop.permute.xlu0 %508
      %512 = vset.pattern.permute.xlu0 0
      %513 = vperm.xlu0 %512, %v435
      %v514 = vpop.permute.xlu0 %513
      %v516 = vmul.f32 %v404, %v439
      %v517 = vmul.f32 %v405, %v444
      %v518 = vmul.f32 %v406, %v449
      %v519 = vmul.f32 %v407, %v454
      %v520 = vmul.f32 %v408, %v459
      %v521 = vmul.f32 %v409, %v464
      %v522 = vmul.f32 %v410, %v469
      %v523 = vmul.f32 %v411, %v474
      %v524 = vmul.f32 %v412, %v479
      %v525 = vmul.f32 %v413, %v484
      %v526 = vmul.f32 %v414, %v489
      %v527 = vmul.f32 %v415, %v494
      %v528 = vmul.f32 %v416, %v499
      %v529 = vmul.f32 %v417, %v504
      %v530 = vmul.f32 %v418, %v509
      %v531 = vmul.f32 %v419, %v514
      %v532 = vpack.c.bf16 %v517, %v516
      %v533 = vpack.c.bf16 %v519, %v518
      %v534 = vpack.c.bf16 %v521, %v520
      %v535 = vpack.c.bf16 %v523, %v522
      %v536 = vpack.c.bf16 %v525, %v524
      %v537 = vpack.c.bf16 %v527, %v526
      %v538 = vpack.c.bf16 %v529, %v528
      %v539 = vpack.c.bf16 %v531, %v530
      %v540 = vld [vmem:[#allocation11] sm:$0xf]
      %v541 = vld [vmem:[#allocation11 + $0x4] sm:$0xf]
      %v542 = vld [vmem:[#allocation11 + $0x8] sm:$0xf]
      %v543 = vld [vmem:[#allocation11 + $0xc] sm:$0xf]
      %v544 = vld [vmem:[#allocation11 + $0x10] sm:$0xf]
      %v545 = vld [vmem:[#allocation11 + $0x14] sm:$0xf]
      %v546 = vld [vmem:[#allocation11 + $0x18] sm:$0xf]
      %v547 = vld [vmem:[#allocation11 + $0x1c] sm:$0xf]
      %v548 = vld [vmem:[#allocation11 + $0x20] sm:$0xf]
      %v549 = vld [vmem:[#allocation11 + $0x24] sm:$0xf]
      %v550 = vld [vmem:[#allocation11 + $0x28] sm:$0xf]
      %v551 = vld [vmem:[#allocation11 + $0x2c] sm:$0xf]
      %v552 = vld [vmem:[#allocation11 + $0x30] sm:$0xf]
      %v553 = vld [vmem:[#allocation11 + $0x34] sm:$0xf]
      %v554 = vld [vmem:[#allocation11 + $0x38] sm:$0xf]
      %v555 = vld [vmem:[#allocation11 + $0x3c] sm:$0xf]
      %v556 = vld [vmem:[#allocation9] sm:$0xf]
      %v557 = vld [vmem:[#allocation9 + $0x4] sm:$0xf]
      %v558 = vld [vmem:[#allocation9 + $0x8] sm:$0xf]
      %v559 = vld [vmem:[#allocation9 + $0xc] sm:$0xf]
      %v560 = vld [vmem:[#allocation9 + $0x10] sm:$0xf]
      %v561 = vld [vmem:[#allocation9 + $0x14] sm:$0xf]
      %v562 = vld [vmem:[#allocation9 + $0x18] sm:$0xf]
      %v563 = vld [vmem:[#allocation9 + $0x1c] sm:$0xf]
      %v564 = vld [vmem:[#allocation9 + $0x20] sm:$0xf]
      %v565 = vld [vmem:[#allocation9 + $0x24] sm:$0xf]
      %v566 = vld [vmem:[#allocation9 + $0x28] sm:$0xf]
      %v567 = vld [vmem:[#allocation9 + $0x2c] sm:$0xf]
      %v568 = vld [vmem:[#allocation9 + $0x30] sm:$0xf]
      %v569 = vld [vmem:[#allocation9 + $0x34] sm:$0xf]
      %v570 = vld [vmem:[#allocation9 + $0x38] sm:$0xf]
      %v571 = vld [vmem:[#allocation9 + $0x3c] sm:$0xf]
      %v572 = vld [vmem:[#allocation12] sm:$0xf]
      %v573 = vld [vmem:[#allocation12 + $0x4] sm:$0xf]
      %v574 = vld [vmem:[#allocation12 + $0x8] sm:$0xf]
      %v575 = vld [vmem:[#allocation12 + $0xc] sm:$0xf]
      %v576 = vld [vmem:[#allocation12 + $0x10] sm:$0xf]
      %v577 = vld [vmem:[#allocation12 + $0x14] sm:$0xf]
      %v578 = vld [vmem:[#allocation12 + $0x18] sm:$0xf]
      %v579 = vld [vmem:[#allocation12 + $0x1c] sm:$0xf]
      %v580 = vld [vmem:[#allocation12 + $0x20] sm:$0xf]
      %v581 = vld [vmem:[#allocation12 + $0x24] sm:$0xf]
      %v582 = vld [vmem:[#allocation12 + $0x28] sm:$0xf]
      %v583 = vld [vmem:[#allocation12 + $0x2c] sm:$0xf]
      %v584 = vld [vmem:[#allocation12 + $0x30] sm:$0xf]
      %v585 = vld [vmem:[#allocation12 + $0x34] sm:$0xf]
      %v586 = vld [vmem:[#allocation12 + $0x38] sm:$0xf]
      %v587 = vld [vmem:[#allocation12 + $0x3c] sm:$0xf]
      %v604 = vunpack.c.l.b16 %v556
      %v605 = vunpack.c.l.b16 %v557
      %v606 = vunpack.c.l.b16 %v558
      %v607 = vunpack.c.l.b16 %v559
      %v608 = vunpack.c.l.b16 %v560
      %v609 = vunpack.c.l.b16 %v561
      %v610 = vunpack.c.l.b16 %v562
      %v611 = vunpack.c.l.b16 %v563
      %v612 = vunpack.c.l.b16 %v564
      %v613 = vunpack.c.l.b16 %v565
      %v614 = vunpack.c.l.b16 %v566
      %v615 = vunpack.c.l.b16 %v567
      %v616 = vunpack.c.l.b16 %v568
      %v617 = vunpack.c.l.b16 %v569
      %v618 = vunpack.c.l.b16 %v570
      %v619 = vunpack.c.l.b16 %v571
      %v620 = vpack.c.b16 %v605, %v604
      %v621 = vpack.c.b16 %v607, %v606
      %v622 = vpack.c.b16 %v609, %v608
      %v623 = vpack.c.b16 %v611, %v610
      %v624 = vpack.c.b16 %v613, %v612
      %v625 = vpack.c.b16 %v615, %v614
      %v626 = vpack.c.b16 %v617, %v616
      %v627 = vpack.c.b16 %v619, %v618
      %v652 = vunpack.c.l.b16 %v572
      %v653 = vunpack.c.l.b16 %v573
      %v654 = vunpack.c.l.b16 %v574
      %v655 = vunpack.c.l.b16 %v575
      %v656 = vunpack.c.l.b16 %v576
      %v657 = vunpack.c.l.b16 %v577
      %v658 = vunpack.c.l.b16 %v578
      %v659 = vunpack.c.l.b16 %v579
      %v660 = vunpack.c.l.b16 %v580
      %v661 = vunpack.c.l.b16 %v581
      %v662 = vunpack.c.l.b16 %v582
      %v663 = vunpack.c.l.b16 %v583
      %v664 = vunpack.c.l.b16 %v584
      %v665 = vunpack.c.l.b16 %v585
      %v666 = vunpack.c.l.b16 %v586
      %v667 = vunpack.c.l.b16 %v587
      %v668 = vpack.c.b16 %v653, %v652
      %v669 = vpack.c.b16 %v655, %v654
      %v670 = vpack.c.b16 %v657, %v656
      %v671 = vpack.c.b16 %v659, %v658
      %v672 = vpack.c.b16 %v661, %v660
      %v673 = vpack.c.b16 %v663, %v662
      %v674 = vpack.c.b16 %v665, %v664
      %v675 = vpack.c.b16 %v667, %v666
      %684 = vmatprep.subr.bf16.mxu0 0
      %685 = vmatpush1.bf16.msra.mxu0 %v668
      %686 = vmatprep.subr.bf16.mxu0 0
      %687 = vmatpush1.bf16.msra.mxu0 %v669
      %688 = vmatprep.subr.bf16.mxu0 0
      %689 = vmatpush1.bf16.msra.mxu0 %v670
      %690 = vmatprep.subr.bf16.mxu0 0
      %691 = vmatpush1.bf16.msra.mxu0 %v671
      %692 = vmatprep.subr.bf16.mxu0 0
      %693 = vmatpush1.bf16.msra.mxu0 %v672
      %694 = vmatprep.subr.bf16.mxu0 0
      %695 = vmatpush1.bf16.msra.mxu0 %v673
      %696 = vmatprep.subr.bf16.mxu0 0
      %697 = vmatpush1.bf16.msra.mxu0 %v674
      %698 = vmatprep.subr.bf16.mxu0 0
      %699 = vmatpush1.bf16.msra.mxu0 %v675
      %700 = vmatprep.subr.bf16.mxu0 0
      %701 = vmatpush1.bf16.msra.mxu0 0
      %702 = vmatprep.subr.bf16.mxu0 0
      %703 = vmatpush1.bf16.msra.mxu0 0
      %704 = vmatprep.subr.bf16.mxu0 0
      %705 = vmatpush1.bf16.msra.mxu0 0
      %706 = vmatprep.subr.bf16.mxu0 0
      %707 = vmatpush1.bf16.msra.mxu0 0
      %708 = vmatprep.subr.bf16.mxu0 0
      %709 = vmatpush1.bf16.msra.mxu0 0
      %710 = vmatprep.subr.bf16.mxu0 0
      %711 = vmatpush1.bf16.msra.mxu0 0
      %712 = vmatprep.subr.bf16.mxu0 0
      %713 = vmatpush1.bf16.msra.mxu0 0
      %714 = vmatprep.subr.bf16.mxu0 0
      %715 = vmatpush1.bf16.msra.mxu0 0
      %716 = vmatprep.mubr.bf16.mxu0 0
      %717 = vmatmul.mubr.bf16.gmra.mrb[0].mxu0 %v620
      %v718 = vpop.f32.mrb[0].mxu0
      %v719 = vadd.f32 0.0, %v718
      %v720 = vpop.f32.mrb[0].mxu0
      %v721 = vpop.f32.mrb[0].mxu0
      %v722 = vadd.f32 0.0, %v721
      %v723 = vpop.f32.mrb[0].mxu0
      %724 = vmatprep.mubr.bf16.mxu0 0
      %725 = vmatmul.mubr.bf16.gmra.mrb[0].mxu0 %v621
      %v726 = vpop.f32.mrb[0].mxu0
      %v727 = vadd.f32 0.0, %v726
      %v728 = vpop.f32.mrb[0].mxu0
      %v729 = vpop.f32.mrb[0].mxu0
      %v730 = vadd.f32 0.0, %v729
      %v731 = vpop.f32.mrb[0].mxu0
      %732 = vmatprep.mubr.bf16.mxu0 0
      %733 = vmatmul.mubr.bf16.gmra.mrb[0].mxu0 %v622
      %v734 = vpop.f32.mrb[0].mxu0
      %v735 = vadd.f32 0.0, %v734
      %v736 = vpop.f32.mrb[0].mxu0
      %v737 = vpop.f32.mrb[0].mxu0
      %v738 = vadd.f32 0.0, %v737
      %v739 = vpop.f32.mrb[0].mxu0
      %740 = vmatprep.mubr.bf16.mxu0 0
      %741 = vmatmul.mubr.bf16.gmra.mrb[0].mxu0 %v623
      %v742 = vpop.f32.mrb[0].mxu0
      %v743 = vadd.f32 0.0, %v742
      %v744 = vpop.f32.mrb[0].mxu0
      %v745 = vpop.f32.mrb[0].mxu0
      %v746 = vadd.f32 0.0, %v745
      %v747 = vpop.f32.mrb[0].mxu0
      %748 = vmatprep.mubr.bf16.mxu0 0
      %749 = vmatmul.mubr.bf16.gmra.mrb[0].mxu0 %v624
      %v750 = vpop.f32.mrb[0].mxu0
      %v751 = vadd.f32 0.0, %v750
      %v752 = vpop.f32.mrb[0].mxu0
      %v753 = vpop.f32.mrb[0].mxu0
      %v754 = vadd.f32 0.0, %v753
      %v755 = vpop.f32.mrb[0].mxu0
      %756 = vmatprep.mubr.bf16.mxu0 0
      %757 = vmatmul.mubr.bf16.gmra.mrb[0].mxu0 %v625
      %v758 = vpop.f32.mrb[0].mxu0
      %v759 = vadd.f32 0.0, %v758
      %v760 = vpop.f32.mrb[0].mxu0
      %v761 = vpop.f32.mrb[0].mxu0
      %v762 = vadd.f32 0.0, %v761
      %v763 = vpop.f32.mrb[0].mxu0
      %764 = vmatprep.mubr.bf16.mxu0 0
      %765 = vmatmul.mubr.bf16.gmra.mrb[0].mxu0 %v626
      %v766 = vpop.f32.mrb[0].mxu0
      %v767 = vadd.f32 0.0, %v766
      %v768 = vpop.f32.mrb[0].mxu0
      %v769 = vpop.f32.mrb[0].mxu0
      %v770 = vadd.f32 0.0, %v769
      %v771 = vpop.f32.mrb[0].mxu0
      %772 = vmatprep.mubr.bf16.mxu0 0
      %773 = vmatmul.mubr.bf16.gmra.mrb[0].mxu0 %v627
      %v774 = vpop.f32.mrb[0].mxu0
      %v775 = vadd.f32 0.0, %v774
      %v776 = vpop.f32.mrb[0].mxu0
      %v777 = vpop.f32.mrb[0].mxu0
      %v778 = vadd.f32 0.0, %v777
      %v779 = vpop.f32.mrb[0].mxu0
      %780 = vdwg.mxu0
      %v797 = vunpack.c.l.b16 %v540
      %v798 = vunpack.c.l.b16 %v541
      %v799 = vunpack.c.l.b16 %v542
      %v800 = vunpack.c.l.b16 %v543
      %v801 = vunpack.c.l.b16 %v544
      %v802 = vunpack.c.l.b16 %v545
      %v803 = vunpack.c.l.b16 %v546
      %v804 = vunpack.c.l.b16 %v547
      %v805 = vunpack.c.l.b16 %v548
      %v806 = vunpack.c.l.b16 %v549
      %v807 = vunpack.c.l.b16 %v550
      %v808 = vunpack.c.l.b16 %v551
      %v809 = vunpack.c.l.b16 %v552
      %v810 = vunpack.c.l.b16 %v553
      %v811 = vunpack.c.l.b16 %v554
      %v812 = vunpack.c.l.b16 %v555
      %v813 = vpack.c.b16 %v798, %v797
      %v814 = vpack.c.b16 %v800, %v799
      %v815 = vpack.c.b16 %v802, %v801
      %v816 = vpack.c.b16 %v804, %v803
      %v817 = vpack.c.b16 %v806, %v805
      %v818 = vpack.c.b16 %v808, %v807
      %v819 = vpack.c.b16 %v810, %v809
      %v820 = vpack.c.b16 %v812, %v811
      %829 = vmatprep.subr.bf16.mxu0 0
      %830 = vmatpush1.bf16.msra.mxu0 %v813
      %831 = vmatprep.subr.bf16.mxu0 0
      %832 = vmatpush1.bf16.msra.mxu0 %v814
      %833 = vmatprep.subr.bf16.mxu0 0
      %834 = vmatpush1.bf16.msra.mxu0 %v815
      %835 = vmatprep.subr.bf16.mxu0 0
      %836 = vmatpush1.bf16.msra.mxu0 %v816
      %837 = vmatprep.subr.bf16.mxu0 0
      %838 = vmatpush1.bf16.msra.mxu0 %v817
      %839 = vmatprep.subr.bf16.mxu0 0
      %840 = vmatpush1.bf16.msra.mxu0 %v818
      %841 = vmatprep.subr.bf16.mxu0 0
      %842 = vmatpush1.bf16.msra.mxu0 %v819
      %843 = vmatprep.subr.bf16.mxu0 0
      %844 = vmatpush1.bf16.msra.mxu0 %v820
      %845 = vmatprep.subr.bf16.mxu0 0
      %846 = vmatpush1.bf16.msra.mxu0 0
      %847 = vmatprep.subr.bf16.mxu0 0
      %848 = vmatpush1.bf16.msra.mxu0 0
      %849 = vmatprep.subr.bf16.mxu0 0
      %850 = vmatpush1.bf16.msra.mxu0 0
      %851 = vmatprep.subr.bf16.mxu0 0
      %852 = vmatpush1.bf16.msra.mxu0 0
      %853 = vmatprep.subr.bf16.mxu0 0
      %854 = vmatpush1.bf16.msra.mxu0 0
      %855 = vmatprep.subr.bf16.mxu0 0
      %856 = vmatpush1.bf16.msra.mxu0 0
      %857 = vmatprep.subr.bf16.mxu0 0
      %858 = vmatpush1.bf16.msra.mxu0 0
      %859 = vmatprep.subr.bf16.mxu0 0
      %860 = vmatpush1.bf16.msra.mxu0 0
      %861 = vmatprep.mubr.bf16.mxu0 0
      %862 = vmatmul.mubr.bf16.gmra.mrb[0].mxu0 %v532
      %v863 = vpop.f32.mrb[0].mxu0
      %v864 = vadd.f32 %v719, %v863
      %v865 = vpop.f32.mrb[0].mxu0
      %v866 = vpop.f32.mrb[0].mxu0
      %v867 = vadd.f32 %v722, %v866
      %v868 = vpop.f32.mrb[0].mxu0
      %869 = vmatprep.mubr.bf16.mxu0 0
      %870 = vmatmul.mubr.bf16.gmra.mrb[0].mxu0 %v533
      %v871 = vpop.f32.mrb[0].mxu0
      %v872 = vadd.f32 %v727, %v871
      %v873 = vpop.f32.mrb[0].mxu0
      %v874 = vpop.f32.mrb[0].mxu0
      %v875 = vadd.f32 %v730, %v874
      %v876 = vpop.f32.mrb[0].mxu0
      %877 = vmatprep.mubr.bf16.mxu0 0
      %878 = vmatmul.mubr.bf16.gmra.mrb[0].mxu0 %v534
      %v879 = vpop.f32.mrb[0].mxu0
      %v880 = vadd.f32 %v735, %v879
      %v881 = vpop.f32.mrb[0].mxu0
      %v882 = vpop.f32.mrb[0].mxu0
      %v883 = vadd.f32 %v738, %v882
      %v884 = vpop.f32.mrb[0].mxu0
      %885 = vmatprep.mubr.bf16.mxu0 0
      %886 = vmatmul.mubr.bf16.gmra.mrb[0].mxu0 %v535
      %v887 = vpop.f32.mrb[0].mxu0
      %v888 = vadd.f32 %v743, %v887
      %v889 = vpop.f32.mrb[0].mxu0
      %v890 = vpop.f32.mrb[0].mxu0
      %v891 = vadd.f32 %v746, %v890
      %v892 = vpop.f32.mrb[0].mxu0
      %893 = vmatprep.mubr.bf16.mxu0 0
      %894 = vmatmul.mubr.bf16.gmra.mrb[0].mxu0 %v536
      %v895 = vpop.f32.mrb[0].mxu0
      %v896 = vadd.f32 %v751, %v895
      %v897 = vpop.f32.mrb[0].mxu0
      %v898 = vpop.f32.mrb[0].mxu0
      %v899 = vadd.f32 %v754, %v898
      %v900 = vpop.f32.mrb[0].mxu0
      %901 = vmatprep.mubr.bf16.mxu0 0
      %902 = vmatmul.mubr.bf16.gmra.mrb[0].mxu0 %v537
      %v903 = vpop.f32.mrb[0].mxu0
      %v904 = vadd.f32 %v759, %v903
      %v905 = vpop.f32.mrb[0].mxu0
      %v906 = vpop.f32.mrb[0].mxu0
      %v907 = vadd.f32 %v762, %v906
      %v908 = vpop.f32.mrb[0].mxu0
      %909 = vmatprep.mubr.bf16.mxu0 0
      %910 = vmatmul.mubr.bf16.gmra.mrb[0].mxu0 %v538
      %v911 = vpop.f32.mrb[0].mxu0
      %v912 = vadd.f32 %v767, %v911
      %v913 = vpop.f32.mrb[0].mxu0
      %v914 = vpop.f32.mrb[0].mxu0
      %v915 = vadd.f32 %v770, %v914
      %v916 = vpop.f32.mrb[0].mxu0
      %917 = vmatprep.mubr.bf16.mxu0 0
      %918 = vmatmul.mubr.bf16.gmra.mrb[0].mxu0 %v539
      %v919 = vpop.f32.mrb[0].mxu0
      %v920 = vadd.f32 %v775, %v919
      %v921 = vpop.f32.mrb[0].mxu0
      %v922 = vpop.f32.mrb[0].mxu0
      %v923 = vadd.f32 %v778, %v922
      %v924 = vpop.f32.mrb[0].mxu0
      %925 = vdwg.mxu0
      %v926 = vld [vmem:[%s8] sm:$0x1]
      %v928 = vlaneseq
      %v929 = vshrl.u32 %v928, 7
      %v930 = vsub.s32 0, %v929
      %v931 = vrot.slane %v926, %v930
      %v933 = vadd.f32 %v864, %v931
      %v934 = vadd.f32 %v867, %v931
      %v935 = vadd.f32 %v872, %v931
      %v936 = vadd.f32 %v875, %v931
      %v937 = vadd.f32 %v880, %v931
      %v938 = vadd.f32 %v883, %v931
      %v939 = vadd.f32 %v888, %v931
      %v940 = vadd.f32 %v891, %v931
      %v941 = vadd.f32 %v896, %v931
      %v942 = vadd.f32 %v899, %v931
      %v943 = vadd.f32 %v904, %v931
      %v944 = vadd.f32 %v907, %v931
      %v945 = vadd.f32 %v912, %v931
      %v946 = vadd.f32 %v915, %v931
      %v947 = vadd.f32 %v920, %v931
      %v948 = vadd.f32 %v923, %v931
      %v949 = vmax.f32 %v933, 0.0
      %v950 = vmax.f32 %v934, 0.0
      %v951 = vmax.f32 %v935, 0.0
      %v952 = vmax.f32 %v936, 0.0
      %v953 = vmax.f32 %v937, 0.0
      %v954 = vmax.f32 %v938, 0.0
      %v955 = vmax.f32 %v939, 0.0
      %v956 = vmax.f32 %v940, 0.0
      %v957 = vmax.f32 %v941, 0.0
      %v958 = vmax.f32 %v942, 0.0
      %v959 = vmax.f32 %v943, 0.0
      %v960 = vmax.f32 %v944, 0.0
      %v961 = vmax.f32 %v945, 0.0
      %v962 = vmax.f32 %v946, 0.0
      %v963 = vmax.f32 %v947, 0.0
      %v964 = vmax.f32 %v948, 0.0
      %v965 = vpack.c.bf16 %v950, %v949
      %v966 = vpack.c.bf16 %v952, %v951
      %v967 = vpack.c.bf16 %v954, %v953
      %v968 = vpack.c.bf16 %v956, %v955
      %v969 = vpack.c.bf16 %v958, %v957
      %v970 = vpack.c.bf16 %v960, %v959
      %v971 = vpack.c.bf16 %v962, %v961
      %v972 = vpack.c.bf16 %v964, %v963
      %v973 = vld [vmem:[%s9] sm:$0xff]
      %v974 = vld [vmem:[%s9 + $0x8] sm:$0xff]
      %v975 = vld [vmem:[%s9 + $0x10] sm:$0xff]
      %v976 = vld [vmem:[%s9 + $0x18] sm:$0xff]
      %v977 = vld [vmem:[%s9 + $0x20] sm:$0xff]
      %v978 = vld [vmem:[%s9 + $0x28] sm:$0xff]
      %v979 = vld [vmem:[%s9 + $0x30] sm:$0xff]
      %v980 = vld [vmem:[%s9 + $0x38] sm:$0xff]
      %v981 = vld [vmem:[%s9 + $0x40] sm:$0xff]
      %v982 = vld [vmem:[%s9 + $0x48] sm:$0xff]
      %v983 = vld [vmem:[%s9 + $0x50] sm:$0xff]
      %v984 = vld [vmem:[%s9 + $0x58] sm:$0xff]
      %v985 = vld [vmem:[%s9 + $0x60] sm:$0xff]
      %v986 = vld [vmem:[%s9 + $0x68] sm:$0xff]
      %v987 = vld [vmem:[%s9 + $0x70] sm:$0xff]
      %v988 = vld [vmem:[%s9 + $0x78] sm:$0xff]
      %v989 = vld [vmem:[%s9 + $0x80] sm:$0xff]
      %v990 = vld [vmem:[%s9 + $0x88] sm:$0xff]
      %v991 = vld [vmem:[%s9 + $0x90] sm:$0xff]
      %v992 = vld [vmem:[%s9 + $0x98] sm:$0xff]
      %v993 = vld [vmem:[%s9 + $0xa0] sm:$0xff]
      %v994 = vld [vmem:[%s9 + $0xa8] sm:$0xff]
      %v995 = vld [vmem:[%s9 + $0xb0] sm:$0xff]
      %v996 = vld [vmem:[%s9 + $0xb8] sm:$0xff]
      %v997 = vld [vmem:[%s9 + $0xc0] sm:$0xff]
      %v998 = vld [vmem:[%s9 + $0xc8] sm:$0xff]
      %v999 = vld [vmem:[%s9 + $0xd0] sm:$0xff]
      %v1000 = vld [vmem:[%s9 + $0xd8] sm:$0xff]
      %v1001 = vld [vmem:[%s9 + $0xe0] sm:$0xff]
      %v1002 = vld [vmem:[%s9 + $0xe8] sm:$0xff]
      %v1003 = vld [vmem:[%s9 + $0xf0] sm:$0xff]
      %v1004 = vld [vmem:[%s9 + $0xf8] sm:$0xff]
      %v1005 = vld [vmem:[%s10] sm:$0xf]
      %v1007 = vlaneseq
      %v1008 = vshrl.u32 %v1007, 7
      %v1009 = vsub.s32 0, %v1008
      %v1010 = vrot.slane %v1005, %v1009
      %v1011 = vlaneseq
      %v1012 = vshrl.u32 %v1011, 7
      %v1013 = vsub.s32 1, %v1012
      %v1014 = vrot.slane %v1005, %v1013
      %v1015 = vlaneseq
      %v1016 = vshrl.u32 %v1015, 7
      %v1017 = vsub.s32 2, %v1016
      %v1018 = vrot.slane %v1005, %v1017
      %v1019 = vlaneseq
      %v1020 = vshrl.u32 %v1019, 7
      %v1021 = vsub.s32 3, %v1020
      %v1022 = vrot.slane %v1005, %v1021
      %v1059 = vunpack.c.l.b16 %v973
      %v1060 = vunpack.c.h.b16 %v973
      %v1061 = vunpack.c.l.b16 %v974
      %v1062 = vunpack.c.h.b16 %v974
      %v1063 = vunpack.c.l.b16 %v975
      %v1064 = vunpack.c.h.b16 %v975
      %v1065 = vunpack.c.l.b16 %v976
      %v1066 = vunpack.c.h.b16 %v976
      %v1067 = vunpack.c.l.b16 %v977
      %v1068 = vunpack.c.h.b16 %v977
      %v1069 = vunpack.c.l.b16 %v978
      %v1070 = vunpack.c.h.b16 %v978
      %v1071 = vunpack.c.l.b16 %v979
      %v1072 = vunpack.c.h.b16 %v979
      %v1073 = vunpack.c.l.b16 %v980
      %v1074 = vunpack.c.h.b16 %v980
      %v1075 = vunpack.c.l.b16 %v981
      %v1076 = vunpack.c.h.b16 %v981
      %v1077 = vunpack.c.l.b16 %v982
      %v1078 = vunpack.c.h.b16 %v982
      %v1079 = vunpack.c.l.b16 %v983
      %v1080 = vunpack.c.h.b16 %v983
      %v1081 = vunpack.c.l.b16 %v984
      %v1082 = vunpack.c.h.b16 %v984
      %v1083 = vunpack.c.l.b16 %v985
      %v1084 = vunpack.c.h.b16 %v985
      %v1085 = vunpack.c.l.b16 %v986
      %v1086 = vunpack.c.h.b16 %v986
      %v1087 = vunpack.c.l.b16 %v987
      %v1088 = vunpack.c.h.b16 %v987
      %v1089 = vunpack.c.l.b16 %v988
      %v1090 = vunpack.c.h.b16 %v988
      %v1091 = vunpack.c.l.b16 %v989
      %v1092 = vunpack.c.h.b16 %v989
      %v1093 = vunpack.c.l.b16 %v990
      %v1094 = vunpack.c.h.b16 %v990
      %v1095 = vunpack.c.l.b16 %v991
      %v1096 = vunpack.c.h.b16 %v991
      %v1097 = vunpack.c.l.b16 %v992
      %v1098 = vunpack.c.h.b16 %v992
      %v1099 = vunpack.c.l.b16 %v993
      %v1100 = vunpack.c.h.b16 %v993
      %v1101 = vunpack.c.l.b16 %v994
      %v1102 = vunpack.c.h.b16 %v994
      %v1103 = vunpack.c.l.b16 %v995
      %v1104 = vunpack.c.h.b16 %v995
      %v1105 = vunpack.c.l.b16 %v996
      %v1106 = vunpack.c.h.b16 %v996
      %v1107 = vunpack.c.l.b16 %v997
      %v1108 = vunpack.c.h.b16 %v997
      %v1109 = vunpack.c.l.b16 %v998
      %v1110 = vunpack.c.h.b16 %v998
      %v1111 = vunpack.c.l.b16 %v999
      %v1112 = vunpack.c.h.b16 %v999
      %v1113 = vunpack.c.l.b16 %v1000
      %v1114 = vunpack.c.h.b16 %v1000
      %v1115 = vunpack.c.l.b16 %v1001
      %v1116 = vunpack.c.h.b16 %v1001
      %v1117 = vunpack.c.l.b16 %v1002
      %v1118 = vunpack.c.h.b16 %v1002
      %v1119 = vunpack.c.l.b16 %v1003
      %v1120 = vunpack.c.h.b16 %v1003
      %v1121 = vunpack.c.l.b16 %v1004
      %v1122 = vunpack.c.h.b16 %v1004
      %v1123 = vpack.c.b16 %v1063, %v1059
      %v1124 = vpack.c.b16 %v1064, %v1060
      %v1125 = vpack.c.b16 %v1065, %v1061
      %v1126 = vpack.c.b16 %v1066, %v1062
      %v1127 = vpack.c.b16 %v1071, %v1067
      %v1128 = vpack.c.b16 %v1072, %v1068
      %v1129 = vpack.c.b16 %v1073, %v1069
      %v1130 = vpack.c.b16 %v1074, %v1070
      %v1131 = vpack.c.b16 %v1079, %v1075
      %v1132 = vpack.c.b16 %v1080, %v1076
      %v1133 = vpack.c.b16 %v1081, %v1077
      %v1134 = vpack.c.b16 %v1082, %v1078
      %v1135 = vpack.c.b16 %v1087, %v1083
      %v1136 = vpack.c.b16 %v1088, %v1084
      %v1137 = vpack.c.b16 %v1089, %v1085
      %v1138 = vpack.c.b16 %v1090, %v1086
      %v1139 = vpack.c.b16 %v1095, %v1091
      %v1140 = vpack.c.b16 %v1096, %v1092
      %v1141 = vpack.c.b16 %v1097, %v1093
      %v1142 = vpack.c.b16 %v1098, %v1094
      %v1143 = vpack.c.b16 %v1103, %v1099
      %v1144 = vpack.c.b16 %v1104, %v1100
      %v1145 = vpack.c.b16 %v1105, %v1101
      %v1146 = vpack.c.b16 %v1106, %v1102
      %v1147 = vpack.c.b16 %v1111, %v1107
      %v1148 = vpack.c.b16 %v1112, %v1108
      %v1149 = vpack.c.b16 %v1113, %v1109
      %v1150 = vpack.c.b16 %v1114, %v1110
      %v1151 = vpack.c.b16 %v1119, %v1115
      %v1152 = vpack.c.b16 %v1120, %v1116
      %v1153 = vpack.c.b16 %v1121, %v1117
      %v1154 = vpack.c.b16 %v1122, %v1118
      %1187 = vmatprep.subr.bf16.mxu0 %v1124
      %1188 = vmatpush1.bf16.msra.mxu0 %v1123
      %1189 = vmatprep.subr.bf16.mxu0 %v1128
      %1190 = vmatpush1.bf16.msra.mxu0 %v1127
      %1191 = vmatprep.subr.bf16.mxu0 %v1132
      %1192 = vmatpush1.bf16.msra.mxu0 %v1131
      %1193 = vmatprep.subr.bf16.mxu0 %v1136
      %1194 = vmatpush1.bf16.msra.mxu0 %v1135
      %1195 = vmatprep.subr.bf16.mxu0 %v1140
      %1196 = vmatpush1.bf16.msra.mxu0 %v1139
      %1197 = vmatprep.subr.bf16.mxu0 %v1144
      %1198 = vmatpush1.bf16.msra.mxu0 %v1143
      %1199 = vmatprep.subr.bf16.mxu0 %v1148
      %1200 = vmatpush1.bf16.msra.mxu0 %v1147
      %1201 = vmatprep.subr.bf16.mxu0 %v1152
      %1202 = vmatpush1.bf16.msra.mxu0 %v1151
      %1203 = vmatprep.subr.bf16.mxu0 0
      %1204 = vmatpush1.bf16.msra.mxu0 0
      %1205 = vmatprep.subr.bf16.mxu0 0
      %1206 = vmatpush1.bf16.msra.mxu0 0
      %1207 = vmatprep.subr.bf16.mxu0 0
      %1208 = vmatpush1.bf16.msra.mxu0 0
      %1209 = vmatprep.subr.bf16.mxu0 0
      %1210 = vmatpush1.bf16.msra.mxu0 0
      %1211 = vmatprep.subr.bf16.mxu0 0
      %1212 = vmatpush1.bf16.msra.mxu0 0
      %1213 = vmatprep.subr.bf16.mxu0 0
      %1214 = vmatpush1.bf16.msra.mxu0 0
      %1215 = vmatprep.subr.bf16.mxu0 0
      %1216 = vmatpush1.bf16.msra.mxu0 0
      %1217 = vmatprep.subr.bf16.mxu0 0
      %1218 = vmatpush1.bf16.msra.mxu0 0
      %1219 = vmatprep.mubr.bf16.mxu0 0
      %1220 = vmatmul.mubr.bf16.gmra.mrb[0].mxu0 %v965
      %v1221 = vpop.f32.mrb[0].mxu0
      %v1222 = vadd.f32 %v1010, %v1221
      %v1223 = vpop.f32.mrb[0].mxu0
      %v1224 = vadd.f32 %v1014, %v1223
      %v1225 = vpop.f32.mrb[0].mxu0
      %v1226 = vadd.f32 %v1010, %v1225
      %v1227 = vpop.f32.mrb[0].mxu0
      %v1228 = vadd.f32 %v1014, %v1227
      %1229 = vmatprep.mubr.bf16.mxu0 0
      %1230 = vmatmul.mubr.bf16.gmra.mrb[0].mxu0 %v966
      %v1231 = vpop.f32.mrb[0].mxu0
      %v1232 = vadd.f32 %v1010, %v1231
      %v1233 = vpop.f32.mrb[0].mxu0
      %v1234 = vadd.f32 %v1014, %v1233
      %v1235 = vpop.f32.mrb[0].mxu0
      %v1236 = vadd.f32 %v1010, %v1235
      %v1237 = vpop.f32.mrb[0].mxu0
      %v1238 = vadd.f32 %v1014, %v1237
      %1239 = vmatprep.mubr.bf16.mxu0 0
      %1240 = vmatmul.mubr.bf16.gmra.mrb[0].mxu0 %v967
      %v1241 = vpop.f32.mrb[0].mxu0
      %v1242 = vadd.f32 %v1010, %v1241
      %v1243 = vpop.f32.mrb[0].mxu0
      %v1244 = vadd.f32 %v1014, %v1243
      %v1245 = vpop.f32.mrb[0].mxu0
      %v1246 = vadd.f32 %v1010, %v1245
      %v1247 = vpop.f32.mrb[0].mxu0
      %v1248 = vadd.f32 %v1014, %v1247
      %1249 = vmatprep.mubr.bf16.mxu0 0
      %1250 = vmatmul.mubr.bf16.gmra.mrb[0].mxu0 %v968
      %v1251 = vpop.f32.mrb[0].mxu0
      %v1252 = vadd.f32 %v1010, %v1251
      %v1253 = vpop.f32.mrb[0].mxu0
      %v1254 = vadd.f32 %v1014, %v1253
      %v1255 = vpop.f32.mrb[0].mxu0
      %v1256 = vadd.f32 %v1010, %v1255
      %v1257 = vpop.f32.mrb[0].mxu0
      %v1258 = vadd.f32 %v1014, %v1257
      %1259 = vmatprep.mubr.bf16.mxu0 0
      %1260 = vmatmul.mubr.bf16.gmra.mrb[0].mxu0 %v969
      %v1261 = vpop.f32.mrb[0].mxu0
      %v1262 = vadd.f32 %v1010, %v1261
      %v1263 = vpop.f32.mrb[0].mxu0
      %v1264 = vadd.f32 %v1014, %v1263
      %v1265 = vpop.f32.mrb[0].mxu0
      %v1266 = vadd.f32 %v1010, %v1265
      %v1267 = vpop.f32.mrb[0].mxu0
      %v1268 = vadd.f32 %v1014, %v1267
      %1269 = vmatprep.mubr.bf16.mxu0 0
      %1270 = vmatmul.mubr.bf16.gmra.mrb[0].mxu0 %v970
      %v1271 = vpop.f32.mrb[0].mxu0
      %v1272 = vadd.f32 %v1010, %v1271
      %v1273 = vpop.f32.mrb[0].mxu0
      %v1274 = vadd.f32 %v1014, %v1273
      %v1275 = vpop.f32.mrb[0].mxu0
      %v1276 = vadd.f32 %v1010, %v1275
      %v1277 = vpop.f32.mrb[0].mxu0
      %v1278 = vadd.f32 %v1014, %v1277
      %1279 = vmatprep.mubr.bf16.mxu0 0
      %1280 = vmatmul.mubr.bf16.gmra.mrb[0].mxu0 %v971
      %v1281 = vpop.f32.mrb[0].mxu0
      %v1282 = vadd.f32 %v1010, %v1281
      %v1283 = vpop.f32.mrb[0].mxu0
      %v1284 = vadd.f32 %v1014, %v1283
      %v1285 = vpop.f32.mrb[0].mxu0
      %v1286 = vadd.f32 %v1010, %v1285
      %v1287 = vpop.f32.mrb[0].mxu0
      %v1288 = vadd.f32 %v1014, %v1287
      %1289 = vmatprep.mubr.bf16.mxu0 0
      %1290 = vmatmul.mubr.bf16.gmra.mrb[0].mxu0 %v972
      %v1291 = vpop.f32.mrb[0].mxu0
      %v1292 = vadd.f32 %v1010, %v1291
      %v1293 = vpop.f32.mrb[0].mxu0
      %v1294 = vadd.f32 %v1014, %v1293
      %v1295 = vpop.f32.mrb[0].mxu0
      %v1296 = vadd.f32 %v1010, %v1295
      %v1297 = vpop.f32.mrb[0].mxu0
      %v1298 = vadd.f32 %v1014, %v1297
      %1299 = vdwg.mxu0
      %1300 = vmatprep.subr.bf16.mxu0 %v1126
      %1301 = vmatpush1.bf16.msra.mxu0 %v1125
      %1302 = vmatprep.subr.bf16.mxu0 %v1130
      %1303 = vmatpush1.bf16.msra.mxu0 %v1129
      %1304 = vmatprep.subr.bf16.mxu0 %v1134
      %1305 = vmatpush1.bf16.msra.mxu0 %v1133
      %1306 = vmatprep.subr.bf16.mxu0 %v1138
      %1307 = vmatpush1.bf16.msra.mxu0 %v1137
      %1308 = vmatprep.subr.bf16.mxu0 %v1142
      %1309 = vmatpush1.bf16.msra.mxu0 %v1141
      %1310 = vmatprep.subr.bf16.mxu0 %v1146
      %1311 = vmatpush1.bf16.msra.mxu0 %v1145
      %1312 = vmatprep.subr.bf16.mxu0 %v1150
      %1313 = vmatpush1.bf16.msra.mxu0 %v1149
      %1314 = vmatprep.subr.bf16.mxu0 %v1154
      %1315 = vmatpush1.bf16.msra.mxu0 %v1153
      %1316 = vmatprep.subr.bf16.mxu0 0
      %1317 = vmatpush1.bf16.msra.mxu0 0
      %1318 = vmatprep.subr.bf16.mxu0 0
      %1319 = vmatpush1.bf16.msra.mxu0 0
      %1320 = vmatprep.subr.bf16.mxu0 0
      %1321 = vmatpush1.bf16.msra.mxu0 0
      %1322 = vmatprep.subr.bf16.mxu0 0
      %1323 = vmatpush1.bf16.msra.mxu0 0
      %1324 = vmatprep.subr.bf16.mxu0 0
      %1325 = vmatpush1.bf16.msra.mxu0 0
      %1326 = vmatprep.subr.bf16.mxu0 0
      %1327 = vmatpush1.bf16.msra.mxu0 0
      %1328 = vmatprep.subr.bf16.mxu0 0
      %1329 = vmatpush1.bf16.msra.mxu0 0
      %1330 = vmatprep.subr.bf16.mxu0 0
      %1331 = vmatpush1.bf16.msra.mxu0 0
      %1332 = vmatprep.mubr.bf16.mxu0 0
      %1333 = vmatmul.mubr.bf16.gmra.mrb[0].mxu0 %v965
      %v1334 = vpop.f32.mrb[0].mxu0
      %v1335 = vadd.f32 %v1018, %v1334
      %v1336 = vpop.f32.mrb[0].mxu0
      %v1337 = vadd.f32 %v1022, %v1336
      %v1338 = vpop.f32.mrb[0].mxu0
      %v1339 = vadd.f32 %v1018, %v1338
      %v1340 = vpop.f32.mrb[0].mxu0
      %v1341 = vadd.f32 %v1022, %v1340
      %1342 = vmatprep.mubr.bf16.mxu0 0
      %1343 = vmatmul.mubr.bf16.gmra.mrb[0].mxu0 %v966
      %v1344 = vpop.f32.mrb[0].mxu0
      %v1345 = vadd.f32 %v1018, %v1344
      %v1346 = vpop.f32.mrb[0].mxu0
      %v1347 = vadd.f32 %v1022, %v1346
      %v1348 = vpop.f32.mrb[0].mxu0
      %v1349 = vadd.f32 %v1018, %v1348
      %v1350 = vpop.f32.mrb[0].mxu0
      %v1351 = vadd.f32 %v1022, %v1350
      %1352 = vmatprep.mubr.bf16.mxu0 0
      %1353 = vmatmul.mubr.bf16.gmra.mrb[0].mxu0 %v967
      %v1354 = vpop.f32.mrb[0].mxu0
      %v1355 = vadd.f32 %v1018, %v1354
      %v1356 = vpop.f32.mrb[0].mxu0
      %v1357 = vadd.f32 %v1022, %v1356
      %v1358 = vpop.f32.mrb[0].mxu0
      %v1359 = vadd.f32 %v1018, %v1358
      %v1360 = vpop.f32.mrb[0].mxu0
      %v1361 = vadd.f32 %v1022, %v1360
      %1362 = vmatprep.mubr.bf16.mxu0 0
      %1363 = vmatmul.mubr.bf16.gmra.mrb[0].mxu0 %v968
      %v1364 = vpop.f32.mrb[0].mxu0
      %v1365 = vadd.f32 %v1018, %v1364
      %v1366 = vpop.f32.mrb[0].mxu0
      %v1367 = vadd.f32 %v1022, %v1366
      %v1368 = vpop.f32.mrb[0].mxu0
      %v1369 = vadd.f32 %v1018, %v1368
      %v1370 = vpop.f32.mrb[0].mxu0
      %v1371 = vadd.f32 %v1022, %v1370
      %1372 = vmatprep.mubr.bf16.mxu0 0
      %1373 = vmatmul.mubr.bf16.gmra.mrb[0].mxu0 %v969
      %v1374 = vpop.f32.mrb[0].mxu0
      %v1375 = vadd.f32 %v1018, %v1374
      %v1376 = vpop.f32.mrb[0].mxu0
      %v1377 = vadd.f32 %v1022, %v1376
      %v1378 = vpop.f32.mrb[0].mxu0
      %v1379 = vadd.f32 %v1018, %v1378
      %v1380 = vpop.f32.mrb[0].mxu0
      %v1381 = vadd.f32 %v1022, %v1380
      %1382 = vmatprep.mubr.bf16.mxu0 0
      %1383 = vmatmul.mubr.bf16.gmra.mrb[0].mxu0 %v970
      %v1384 = vpop.f32.mrb[0].mxu0
      %v1385 = vadd.f32 %v1018, %v1384
      %v1386 = vpop.f32.mrb[0].mxu0
      %v1387 = vadd.f32 %v1022, %v1386
      %v1388 = vpop.f32.mrb[0].mxu0
      %v1389 = vadd.f32 %v1018, %v1388
      %v1390 = vpop.f32.mrb[0].mxu0
      %v1391 = vadd.f32 %v1022, %v1390
      %1392 = vmatprep.mubr.bf16.mxu0 0
      %1393 = vmatmul.mubr.bf16.gmra.mrb[0].mxu0 %v971
      %v1394 = vpop.f32.mrb[0].mxu0
      %v1395 = vadd.f32 %v1018, %v1394
      %v1396 = vpop.f32.mrb[0].mxu0
      %v1397 = vadd.f32 %v1022, %v1396
      %v1398 = vpop.f32.mrb[0].mxu0
      %v1399 = vadd.f32 %v1018, %v1398
      %v1400 = vpop.f32.mrb[0].mxu0
      %v1401 = vadd.f32 %v1022, %v1400
      %1402 = vmatprep.mubr.bf16.mxu0 0
      %1403 = vmatmul.mubr.bf16.gmra.mrb[0].mxu0 %v972
      %v1404 = vpop.f32.mrb[0].mxu0
      %v1405 = vadd.f32 %v1018, %v1404
      %v1406 = vpop.f32.mrb[0].mxu0
      %v1407 = vadd.f32 %v1022, %v1406
      %v1408 = vpop.f32.mrb[0].mxu0
      %v1409 = vadd.f32 %v1018, %v1408
      %v1410 = vpop.f32.mrb[0].mxu0
      %v1411 = vadd.f32 %v1022, %v1410
      %1412 = vdwg.mxu0
      %v1413 = vmax.f32 %v1222, 0.0
      %v1414 = vmax.f32 %v1224, 0.0
      %v1415 = vmax.f32 %v1335, 0.0
      %v1416 = vmax.f32 %v1337, 0.0
      %v1417 = vmax.f32 %v1226, 0.0
      %v1418 = vmax.f32 %v1228, 0.0
      %v1419 = vmax.f32 %v1339, 0.0
      %v1420 = vmax.f32 %v1341, 0.0
      %v1421 = vmax.f32 %v1232, 0.0
      %v1422 = vmax.f32 %v1234, 0.0
      %v1423 = vmax.f32 %v1345, 0.0
      %v1424 = vmax.f32 %v1347, 0.0
      %v1425 = vmax.f32 %v1236, 0.0
      %v1426 = vmax.f32 %v1238, 0.0
      %v1427 = vmax.f32 %v1349, 0.0
      %v1428 = vmax.f32 %v1351, 0.0
      %v1429 = vmax.f32 %v1242, 0.0
      %v1430 = vmax.f32 %v1244, 0.0
      %v1431 = vmax.f32 %v1355, 0.0
      %v1432 = vmax.f32 %v1357, 0.0
      %v1433 = vmax.f32 %v1246, 0.0
      %v1434 = vmax.f32 %v1248, 0.0
      %v1435 = vmax.f32 %v1359, 0.0
      %v1436 = vmax.f32 %v1361, 0.0
      %v1437 = vmax.f32 %v1252, 0.0
      %v1438 = vmax.f32 %v1254, 0.0
      %v1439 = vmax.f32 %v1365, 0.0
      %v1440 = vmax.f32 %v1367, 0.0
      %v1441 = vmax.f32 %v1256, 0.0
      %v1442 = vmax.f32 %v1258, 0.0
      %v1443 = vmax.f32 %v1369, 0.0
      %v1444 = vmax.f32 %v1371, 0.0
      %v1445 = vmax.f32 %v1262, 0.0
      %v1446 = vmax.f32 %v1264, 0.0
      %v1447 = vmax.f32 %v1375, 0.0
      %v1448 = vmax.f32 %v1377, 0.0
      %v1449 = vmax.f32 %v1266, 0.0
      %v1450 = vmax.f32 %v1268, 0.0
      %v1451 = vmax.f32 %v1379, 0.0
      %v1452 = vmax.f32 %v1381, 0.0
      %v1453 = vmax.f32 %v1272, 0.0
      %v1454 = vmax.f32 %v1274, 0.0
      %v1455 = vmax.f32 %v1385, 0.0
      %v1456 = vmax.f32 %v1387, 0.0
      %v1457 = vmax.f32 %v1276, 0.0
      %v1458 = vmax.f32 %v1278, 0.0
      %v1459 = vmax.f32 %v1389, 0.0
      %v1460 = vmax.f32 %v1391, 0.0
      %v1461 = vmax.f32 %v1282, 0.0
      %v1462 = vmax.f32 %v1284, 0.0
      %v1463 = vmax.f32 %v1395, 0.0
      %v1464 = vmax.f32 %v1397, 0.0
      %v1465 = vmax.f32 %v1286, 0.0
      %v1466 = vmax.f32 %v1288, 0.0
      %v1467 = vmax.f32 %v1399, 0.0
      %v1468 = vmax.f32 %v1401, 0.0
      %v1469 = vmax.f32 %v1292, 0.0
      %v1470 = vmax.f32 %v1294, 0.0
      %v1471 = vmax.f32 %v1405, 0.0
      %v1472 = vmax.f32 %v1407, 0.0
      %v1473 = vmax.f32 %v1296, 0.0
      %v1474 = vmax.f32 %v1298, 0.0
      %v1475 = vmax.f32 %v1409, 0.0
      %v1476 = vmax.f32 %v1411, 0.0
      %v1477 = vpack.c.bf16 %v1417, %v1413
      %v1478 = vpack.c.bf16 %v1418, %v1414
      %v1479 = vpack.c.bf16 %v1419, %v1415
      %v1480 = vpack.c.bf16 %v1420, %v1416
      %v1481 = vpack.c.bf16 %v1425, %v1421
      %v1482 = vpack.c.bf16 %v1426, %v1422
      %v1483 = vpack.c.bf16 %v1427, %v1423
      %v1484 = vpack.c.bf16 %v1428, %v1424
      %v1485 = vpack.c.bf16 %v1433, %v1429
      %v1486 = vpack.c.bf16 %v1434, %v1430
      %v1487 = vpack.c.bf16 %v1435, %v1431
      %v1488 = vpack.c.bf16 %v1436, %v1432
      %v1489 = vpack.c.bf16 %v1441, %v1437
      %v1490 = vpack.c.bf16 %v1442, %v1438
      %v1491 = vpack.c.bf16 %v1443, %v1439
      %v1492 = vpack.c.bf16 %v1444, %v1440
      %v1493 = vpack.c.bf16 %v1449, %v1445
      %v1494 = vpack.c.bf16 %v1450, %v1446
      %v1495 = vpack.c.bf16 %v1451, %v1447
      %v1496 = vpack.c.bf16 %v1452, %v1448
      %v1497 = vpack.c.bf16 %v1457, %v1453
      %v1498 = vpack.c.bf16 %v1458, %v1454
      %v1499 = vpack.c.bf16 %v1459, %v1455
      %v1500 = vpack.c.bf16 %v1460, %v1456
      %v1501 = vpack.c.bf16 %v1465, %v1461
      %v1502 = vpack.c.bf16 %v1466, %v1462
      %v1503 = vpack.c.bf16 %v1467, %v1463
      %v1504 = vpack.c.bf16 %v1468, %v1464
      %v1505 = vpack.c.bf16 %v1473, %v1469
      %v1506 = vpack.c.bf16 %v1474, %v1470
      %v1507 = vpack.c.bf16 %v1475, %v1471
      %v1508 = vpack.c.bf16 %v1476, %v1472
      %v1509 = vld [vmem:[#allocation14] sm:$0xf]
      %v1510 = vld [vmem:[#allocation14 + $0x4] sm:$0xf]
      %v1511 = vld [vmem:[#allocation14 + $0x8] sm:$0xf]
      %v1512 = vld [vmem:[#allocation14 + $0xc] sm:$0xf]
      %v1513 = vld [vmem:[#allocation14 + $0x10] sm:$0xf]
      %v1514 = vld [vmem:[#allocation14 + $0x14] sm:$0xf]
      %v1515 = vld [vmem:[#allocation14 + $0x18] sm:$0xf]
      %v1516 = vld [vmem:[#allocation14 + $0x1c] sm:$0xf]
      %v1517 = vld [vmem:[#allocation14 + $0x20] sm:$0xf]
      %v1518 = vld [vmem:[#allocation14 + $0x24] sm:$0xf]
      %v1519 = vld [vmem:[#allocation14 + $0x28] sm:$0xf]
      %v1520 = vld [vmem:[#allocation14 + $0x2c] sm:$0xf]
      %v1521 = vld [vmem:[#allocation14 + $0x30] sm:$0xf]
      %v1522 = vld [vmem:[#allocation14 + $0x34] sm:$0xf]
      %v1523 = vld [vmem:[#allocation14 + $0x38] sm:$0xf]
      %v1524 = vld [vmem:[#allocation14 + $0x3c] sm:$0xf]
      %v1525 = vld [vmem:[#allocation14 + $0x40] sm:$0xf]
      %v1526 = vld [vmem:[#allocation14 + $0x44] sm:$0xf]
      %v1527 = vld [vmem:[#allocation14 + $0x48] sm:$0xf]
      %v1528 = vld [vmem:[#allocation14 + $0x4c] sm:$0xf]
      %v1529 = vld [vmem:[#allocation14 + $0x50] sm:$0xf]
      %v1530 = vld [vmem:[#allocation14 + $0x54] sm:$0xf]
      %v1531 = vld [vmem:[#allocation14 + $0x58] sm:$0xf]
      %v1532 = vld [vmem:[#allocation14 + $0x5c] sm:$0xf]
      %v1533 = vld [vmem:[#allocation14 + $0x60] sm:$0xf]
      %v1534 = vld [vmem:[#allocation14 + $0x64] sm:$0xf]
      %v1535 = vld [vmem:[#allocation14 + $0x68] sm:$0xf]
      %v1536 = vld [vmem:[#allocation14 + $0x6c] sm:$0xf]
      %v1537 = vld [vmem:[#allocation14 + $0x70] sm:$0xf]
      %v1538 = vld [vmem:[#allocation14 + $0x74] sm:$0xf]
      %v1539 = vld [vmem:[#allocation14 + $0x78] sm:$0xf]
      %v1540 = vld [vmem:[#allocation14 + $0x7c] sm:$0xf]
      %v1541 = vld [vmem:[#allocation14 + $0x80] sm:$0xf]
      %v1542 = vld [vmem:[#allocation14 + $0x84] sm:$0xf]
      %v1543 = vld [vmem:[#allocation14 + $0x88] sm:$0xf]
      %v1544 = vld [vmem:[#allocation14 + $0x8c] sm:$0xf]
      %v1545 = vld [vmem:[#allocation14 + $0x90] sm:$0xf]
      %v1546 = vld [vmem:[#allocation14 + $0x94] sm:$0xf]
      %v1547 = vld [vmem:[#allocation14 + $0x98] sm:$0xf]
      %v1548 = vld [vmem:[#allocation14 + $0x9c] sm:$0xf]
      %v1549 = vld [vmem:[#allocation14 + $0xa0] sm:$0xf]
      %v1550 = vld [vmem:[#allocation14 + $0xa4] sm:$0xf]
      %v1551 = vld [vmem:[#allocation14 + $0xa8] sm:$0xf]
      %v1552 = vld [vmem:[#allocation14 + $0xac] sm:$0xf]
      %v1553 = vld [vmem:[#allocation14 + $0xb0] sm:$0xf]
      %v1554 = vld [vmem:[#allocation14 + $0xb4] sm:$0xf]
      %v1555 = vld [vmem:[#allocation14 + $0xb8] sm:$0xf]
      %v1556 = vld [vmem:[#allocation14 + $0xbc] sm:$0xf]
      %v1557 = vld [vmem:[#allocation14 + $0xc0] sm:$0xf]
      %v1558 = vld [vmem:[#allocation14 + $0xc4] sm:$0xf]
      %v1559 = vld [vmem:[#allocation14 + $0xc8] sm:$0xf]
      %v1560 = vld [vmem:[#allocation14 + $0xcc] sm:$0xf]
      %v1561 = vld [vmem:[#allocation14 + $0xd0] sm:$0xf]
      %v1562 = vld [vmem:[#allocation14 + $0xd4] sm:$0xf]
      %v1563 = vld [vmem:[#allocation14 + $0xd8] sm:$0xf]
      %v1564 = vld [vmem:[#allocation14 + $0xdc] sm:$0xf]
      %v1565 = vld [vmem:[#allocation14 + $0xe0] sm:$0xf]
      %v1566 = vld [vmem:[#allocation14 + $0xe4] sm:$0xf]
      %v1567 = vld [vmem:[#allocation14 + $0xe8] sm:$0xf]
      %v1568 = vld [vmem:[#allocation14 + $0xec] sm:$0xf]
      %v1569 = vld [vmem:[#allocation14 + $0xf0] sm:$0xf]
      %v1570 = vld [vmem:[#allocation14 + $0xf4] sm:$0xf]
      %v1571 = vld [vmem:[#allocation14 + $0xf8] sm:$0xf]
      %v1572 = vld [vmem:[#allocation14 + $0xfc] sm:$0xf]
      %v1573 = vld [vmem:[%s12] sm:$0x1]
      %v1575 = vlaneseq
      %v1576 = vshrl.u32 %v1575, 7
      %v1577 = vsub.s32 0, %v1576
      %v1578 = vrot.slane %v1573, %v1577
      %v1644 = vunpack.c.l.b16 %v1509
      %v1645 = vunpack.c.l.b16 %v1510
      %v1646 = vunpack.c.l.b16 %v1511
      %v1647 = vunpack.c.l.b16 %v1512
      %v1648 = vunpack.c.l.b16 %v1513
      %v1649 = vunpack.c.l.b16 %v1514
      %v1650 = vunpack.c.l.b16 %v1515
      %v1651 = vunpack.c.l.b16 %v1516
      %v1652 = vunpack.c.l.b16 %v1517
      %v1653 = vunpack.c.l.b16 %v1518
      %v1654 = vunpack.c.l.b16 %v1519
      %v1655 = vunpack.c.l.b16 %v1520
      %v1656 = vunpack.c.l.b16 %v1521
      %v1657 = vunpack.c.l.b16 %v1522
      %v1658 = vunpack.c.l.b16 %v1523
      %v1659 = vunpack.c.l.b16 %v1524
      %v1660 = vunpack.c.l.b16 %v1525
      %v1661 = vunpack.c.l.b16 %v1526
      %v1662 = vunpack.c.l.b16 %v1527
      %v1663 = vunpack.c.l.b16 %v1528
      %v1664 = vunpack.c.l.b16 %v1529
      %v1665 = vunpack.c.l.b16 %v1530
      %v1666 = vunpack.c.l.b16 %v1531
      %v1667 = vunpack.c.l.b16 %v1532
      %v1668 = vunpack.c.l.b16 %v1533
      %v1669 = vunpack.c.l.b16 %v1534
      %v1670 = vunpack.c.l.b16 %v1535
      %v1671 = vunpack.c.l.b16 %v1536
      %v1672 = vunpack.c.l.b16 %v1537
      %v1673 = vunpack.c.l.b16 %v1538
      %v1674 = vunpack.c.l.b16 %v1539
      %v1675 = vunpack.c.l.b16 %v1540
      %v1676 = vunpack.c.l.b16 %v1541
      %v1677 = vunpack.c.l.b16 %v1542
      %v1678 = vunpack.c.l.b16 %v1543
      %v1679 = vunpack.c.l.b16 %v1544
      %v1680 = vunpack.c.l.b16 %v1545
      %v1681 = vunpack.c.l.b16 %v1546
      %v1682 = vunpack.c.l.b16 %v1547
      %v1683 = vunpack.c.l.b16 %v1548
      %v1684 = vunpack.c.l.b16 %v1549
      %v1685 = vunpack.c.l.b16 %v1550
      %v1686 = vunpack.c.l.b16 %v1551
      %v1687 = vunpack.c.l.b16 %v1552
      %v1688 = vunpack.c.l.b16 %v1553
      %v1689 = vunpack.c.l.b16 %v1554
      %v1690 = vunpack.c.l.b16 %v1555
      %v1691 = vunpack.c.l.b16 %v1556
      %v1692 = vunpack.c.l.b16 %v1557
      %v1693 = vunpack.c.l.b16 %v1558
      %v1694 = vunpack.c.l.b16 %v1559
      %v1695 = vunpack.c.l.b16 %v1560
      %v1696 = vunpack.c.l.b16 %v1561
      %v1697 = vunpack.c.l.b16 %v1562
      %v1698 = vunpack.c.l.b16 %v1563
      %v1699 = vunpack.c.l.b16 %v1564
      %v1700 = vunpack.c.l.b16 %v1565
      %v1701 = vunpack.c.l.b16 %v1566
      %v1702 = vunpack.c.l.b16 %v1567
      %v1703 = vunpack.c.l.b16 %v1568
      %v1704 = vunpack.c.l.b16 %v1569
      %v1705 = vunpack.c.l.b16 %v1570
      %v1706 = vunpack.c.l.b16 %v1571
      %v1707 = vunpack.c.l.b16 %v1572
      %v1708 = vpack.c.b16 %v1645, %v1644
      %v1709 = vpack.c.b16 %v1647, %v1646
      %v1710 = vpack.c.b16 %v1649, %v1648
      %v1711 = vpack.c.b16 %v1651, %v1650
      %v1712 = vpack.c.b16 %v1653, %v1652
      %v1713 = vpack.c.b16 %v1655, %v1654
      %v1714 = vpack.c.b16 %v1657, %v1656
      %v1715 = vpack.c.b16 %v1659, %v1658
      %v1716 = vpack.c.b16 %v1661, %v1660
      %v1717 = vpack.c.b16 %v1663, %v1662
      %v1718 = vpack.c.b16 %v1665, %v1664
      %v1719 = vpack.c.b16 %v1667, %v1666
      %v1720 = vpack.c.b16 %v1669, %v1668
      %v1721 = vpack.c.b16 %v1671, %v1670
      %v1722 = vpack.c.b16 %v1673, %v1672
      %v1723 = vpack.c.b16 %v1675, %v1674
      %v1724 = vpack.c.b16 %v1677, %v1676
      %v1725 = vpack.c.b16 %v1679, %v1678
      %v1726 = vpack.c.b16 %v1681, %v1680
      %v1727 = vpack.c.b16 %v1683, %v1682
      %v1728 = vpack.c.b16 %v1685, %v1684
      %v1729 = vpack.c.b16 %v1687, %v1686
      %v1730 = vpack.c.b16 %v1689, %v1688
      %v1731 = vpack.c.b16 %v1691, %v1690
      %v1732 = vpack.c.b16 %v1693, %v1692
      %v1733 = vpack.c.b16 %v1695, %v1694
      %v1734 = vpack.c.b16 %v1697, %v1696
      %v1735 = vpack.c.b16 %v1699, %v1698
      %v1736 = vpack.c.b16 %v1701, %v1700
      %v1737 = vpack.c.b16 %v1703, %v1702
      %v1738 = vpack.c.b16 %v1705, %v1704
      %v1739 = vpack.c.b16 %v1707, %v1706
      %1772 = vmatprep.subr.bf16.mxu0 0
      %1773 = vmatpush1.bf16.msra.mxu0 %v1708
      %1774 = vmatprep.subr.bf16.mxu0 0
      %1775 = vmatpush1.bf16.msra.mxu0 %v1709
      %1776 = vmatprep.subr.bf16.mxu0 0
      %1777 = vmatpush1.bf16.msra.mxu0 %v1710
      %1778 = vmatprep.subr.bf16.mxu0 0
      %1779 = vmatpush1.bf16.msra.mxu0 %v1711
      %1780 = vmatprep.subr.bf16.mxu0 0
      %1781 = vmatpush1.bf16.msra.mxu0 %v1712
      %1782 = vmatprep.subr.bf16.mxu0 0
      %1783 = vmatpush1.bf16.msra.mxu0 %v1713
      %1784 = vmatprep.subr.bf16.mxu0 0
      %1785 = vmatpush1.bf16.msra.mxu0 %v1714
      %1786 = vmatprep.subr.bf16.mxu0 0
      %1787 = vmatpush1.bf16.msra.mxu0 %v1715
      %1788 = vmatprep.subr.bf16.mxu0 0
      %1789 = vmatpush1.bf16.msra.mxu0 %v1716
      %1790 = vmatprep.subr.bf16.mxu0 0
      %1791 = vmatpush1.bf16.msra.mxu0 %v1717
      %1792 = vmatprep.subr.bf16.mxu0 0
      %1793 = vmatpush1.bf16.msra.mxu0 %v1718
      %1794 = vmatprep.subr.bf16.mxu0 0
      %1795 = vmatpush1.bf16.msra.mxu0 %v1719
      %1796 = vmatprep.subr.bf16.mxu0 0
      %1797 = vmatpush1.bf16.msra.mxu0 %v1720
      %1798 = vmatprep.subr.bf16.mxu0 0
      %1799 = vmatpush1.bf16.msra.mxu0 %v1721
      %1800 = vmatprep.subr.bf16.mxu0 0
      %1801 = vmatpush1.bf16.msra.mxu0 %v1722
      %1802 = vmatprep.subr.bf16.mxu0 0
      %1803 = vmatpush1.bf16.msra.mxu0 %v1723
      %1804 = vmatprep.mubr.bf16.mxu0 %v1478
      %1805 = vmatmul.mubr.bf16.gmra.mrb[0].mxu0 %v1477
      %v1806 = vpop.f32.mrb[0].mxu0
      %v1807 = vadd.f32 %v1578, %v1806
      %v1808 = vpop.f32.mrb[0].mxu0
      %v1809 = vpop.f32.mrb[0].mxu0
      %v1810 = vadd.f32 %v1578, %v1809
      %v1811 = vpop.f32.mrb[0].mxu0
      %1812 = vmatprep.mubr.bf16.mxu0 %v1482
      %1813 = vmatmul.mubr.bf16.gmra.mrb[0].mxu0 %v1481
      %v1814 = vpop.f32.mrb[0].mxu0
      %v1815 = vadd.f32 %v1578, %v1814
      %v1816 = vpop.f32.mrb[0].mxu0
      %v1817 = vpop.f32.mrb[0].mxu0
      %v1818 = vadd.f32 %v1578, %v1817
      %v1819 = vpop.f32.mrb[0].mxu0
      %1820 = vmatprep.mubr.bf16.mxu0 %v1486
      %1821 = vmatmul.mubr.bf16.gmra.mrb[0].mxu0 %v1485
      %v1822 = vpop.f32.mrb[0].mxu0
      %v1823 = vadd.f32 %v1578, %v1822
      %v1824 = vpop.f32.mrb[0].mxu0
      %v1825 = vpop.f32.mrb[0].mxu0
      %v1826 = vadd.f32 %v1578, %v1825
      %v1827 = vpop.f32.mrb[0].mxu0
      %1828 = vmatprep.mubr.bf16.mxu0 %v1490
      %1829 = vmatmul.mubr.bf16.gmra.mrb[0].mxu0 %v1489
      %v1830 = vpop.f32.mrb[0].mxu0
      %v1831 = vadd.f32 %v1578, %v1830
      %v1832 = vpop.f32.mrb[0].mxu0
      %v1833 = vpop.f32.mrb[0].mxu0
      %v1834 = vadd.f32 %v1578, %v1833
      %v1835 = vpop.f32.mrb[0].mxu0
      %1836 = vmatprep.mubr.bf16.mxu0 %v1494
      %1837 = vmatmul.mubr.bf16.gmra.mrb[0].mxu0 %v1493
      %v1838 = vpop.f32.mrb[0].mxu0
      %v1839 = vadd.f32 %v1578, %v1838
      %v1840 = vpop.f32.mrb[0].mxu0
      %v1841 = vpop.f32.mrb[0].mxu0
      %v1842 = vadd.f32 %v1578, %v1841
      %v1843 = vpop.f32.mrb[0].mxu0
      %1844 = vmatprep.mubr.bf16.mxu0 %v1498
      %1845 = vmatmul.mubr.bf16.gmra.mrb[0].mxu0 %v1497
      %v1846 = vpop.f32.mrb[0].mxu0
      %v1847 = vadd.f32 %v1578, %v1846
      %v1848 = vpop.f32.mrb[0].mxu0
      %v1849 = vpop.f32.mrb[0].mxu0
      %v1850 = vadd.f32 %v1578, %v1849
      %v1851 = vpop.f32.mrb[0].mxu0
      %1852 = vmatprep.mubr.bf16.mxu0 %v1502
      %1853 = vmatmul.mubr.bf16.gmra.mrb[0].mxu0 %v1501
      %v1854 = vpop.f32.mrb[0].mxu0
      %v1855 = vadd.f32 %v1578, %v1854
      %v1856 = vpop.f32.mrb[0].mxu0
      %v1857 = vpop.f32.mrb[0].mxu0
      %v1858 = vadd.f32 %v1578, %v1857
      %v1859 = vpop.f32.mrb[0].mxu0
      %1860 = vmatprep.mubr.bf16.mxu0 %v1506
      %1861 = vmatmul.mubr.bf16.gmra.mrb[0].mxu0 %v1505
      %v1862 = vpop.f32.mrb[0].mxu0
      %v1863 = vadd.f32 %v1578, %v1862
      %v1864 = vpop.f32.mrb[0].mxu0
      %v1865 = vpop.f32.mrb[0].mxu0
      %v1866 = vadd.f32 %v1578, %v1865
      %v1867 = vpop.f32.mrb[0].mxu0
      %1868 = vdwg.mxu0
      %1869 = vmatprep.subr.bf16.mxu0 0
      %1870 = vmatpush1.bf16.msra.mxu0 %v1724
      %1871 = vmatprep.subr.bf16.mxu0 0
      %1872 = vmatpush1.bf16.msra.mxu0 %v1725
      %1873 = vmatprep.subr.bf16.mxu0 0
      %1874 = vmatpush1.bf16.msra.mxu0 %v1726
      %1875 = vmatprep.subr.bf16.mxu0 0
      %1876 = vmatpush1.bf16.msra.mxu0 %v1727
      %1877 = vmatprep.subr.bf16.mxu0 0
      %1878 = vmatpush1.bf16.msra.mxu0 %v1728
      %1879 = vmatprep.subr.bf16.mxu0 0
      %1880 = vmatpush1.bf16.msra.mxu0 %v1729
      %1881 = vmatprep.subr.bf16.mxu0 0
      %1882 = vmatpush1.bf16.msra.mxu0 %v1730
      %1883 = vmatprep.subr.bf16.mxu0 0
      %1884 = vmatpush1.bf16.msra.mxu0 %v1731
      %1885 = vmatprep.subr.bf16.mxu0 0
      %1886 = vmatpush1.bf16.msra.mxu0 %v1732
      %1887 = vmatprep.subr.bf16.mxu0 0
      %1888 = vmatpush1.bf16.msra.mxu0 %v1733
      %1889 = vmatprep.subr.bf16.mxu0 0
      %1890 = vmatpush1.bf16.msra.mxu0 %v1734
      %1891 = vmatprep.subr.bf16.mxu0 0
      %1892 = vmatpush1.bf16.msra.mxu0 %v1735
      %1893 = vmatprep.subr.bf16.mxu0 0
      %1894 = vmatpush1.bf16.msra.mxu0 %v1736
      %1895 = vmatprep.subr.bf16.mxu0 0
      %1896 = vmatpush1.bf16.msra.mxu0 %v1737
      %1897 = vmatprep.subr.bf16.mxu0 0
      %1898 = vmatpush1.bf16.msra.mxu0 %v1738
      %1899 = vmatprep.subr.bf16.mxu0 0
      %1900 = vmatpush1.bf16.msra.mxu0 %v1739
      %1901 = vmatprep.mubr.bf16.mxu0 %v1480
      %1902 = vmatmul.mubr.bf16.gmra.mrb[0].mxu0 %v1479
      %v1903 = vpop.f32.mrb[0].mxu0
      %v1904 = vadd.f32 %v1807, %v1903
      %v1905 = vpop.f32.mrb[0].mxu0
      %v1906 = vpop.f32.mrb[0].mxu0
      %v1907 = vadd.f32 %v1810, %v1906
      %v1908 = vpop.f32.mrb[0].mxu0
      %1909 = vmatprep.mubr.bf16.mxu0 %v1484
      %1910 = vmatmul.mubr.bf16.gmra.mrb[0].mxu0 %v1483
      %v1911 = vpop.f32.mrb[0].mxu0
      %v1912 = vadd.f32 %v1815, %v1911
      %v1913 = vpop.f32.mrb[0].mxu0
      %v1914 = vpop.f32.mrb[0].mxu0
      %v1915 = vadd.f32 %v1818, %v1914
      %v1916 = vpop.f32.mrb[0].mxu0
      %1917 = vmatprep.mubr.bf16.mxu0 %v1488
      %1918 = vmatmul.mubr.bf16.gmra.mrb[0].mxu0 %v1487
      %v1919 = vpop.f32.mrb[0].mxu0
      %v1920 = vadd.f32 %v1823, %v1919
      %v1921 = vpop.f32.mrb[0].mxu0
      %v1922 = vpop.f32.mrb[0].mxu0
      %v1923 = vadd.f32 %v1826, %v1922
      %v1924 = vpop.f32.mrb[0].mxu0
      %1925 = vmatprep.mubr.bf16.mxu0 %v1492
      %1926 = vmatmul.mubr.bf16.gmra.mrb[0].mxu0 %v1491
      %v1927 = vpop.f32.mrb[0].mxu0
      %v1928 = vadd.f32 %v1831, %v1927
      %v1929 = vpop.f32.mrb[0].mxu0
      %v1930 = vpop.f32.mrb[0].mxu0
      %v1931 = vadd.f32 %v1834, %v1930
      %v1932 = vpop.f32.mrb[0].mxu0
      %1933 = vmatprep.mubr.bf16.mxu0 %v1496
      %1934 = vmatmul.mubr.bf16.gmra.mrb[0].mxu0 %v1495
      %v1935 = vpop.f32.mrb[0].mxu0
      %v1936 = vadd.f32 %v1839, %v1935
      %v1937 = vpop.f32.mrb[0].mxu0
      %v1938 = vpop.f32.mrb[0].mxu0
      %v1939 = vadd.f32 %v1842, %v1938
      %v1940 = vpop.f32.mrb[0].mxu0
      %1941 = vmatprep.mubr.bf16.mxu0 %v1500
      %1942 = vmatmul.mubr.bf16.gmra.mrb[0].mxu0 %v1499
      %v1943 = vpop.f32.mrb[0].mxu0
      %v1944 = vadd.f32 %v1847, %v1943
      %v1945 = vpop.f32.mrb[0].mxu0
      %v1946 = vpop.f32.mrb[0].mxu0
      %v1947 = vadd.f32 %v1850, %v1946
      %v1948 = vpop.f32.mrb[0].mxu0
      %1949 = vmatprep.mubr.bf16.mxu0 %v1504
      %1950 = vmatmul.mubr.bf16.gmra.mrb[0].mxu0 %v1503
      %v1951 = vpop.f32.mrb[0].mxu0
      %v1952 = vadd.f32 %v1855, %v1951
      %v1953 = vpop.f32.mrb[0].mxu0
      %v1954 = vpop.f32.mrb[0].mxu0
      %v1955 = vadd.f32 %v1858, %v1954
      %v1956 = vpop.f32.mrb[0].mxu0
      %1957 = vmatprep.mubr.bf16.mxu0 %v1508
      %1958 = vmatmul.mubr.bf16.gmra.mrb[0].mxu0 %v1507
      %v1959 = vpop.f32.mrb[0].mxu0
      %v1960 = vadd.f32 %v1863, %v1959
      %v1961 = vpop.f32.mrb[0].mxu0
      %v1962 = vpop.f32.mrb[0].mxu0
      %v1963 = vadd.f32 %v1866, %v1962
      %v1964 = vpop.f32.mrb[0].mxu0
      %1965 = vdwg.mxu0
      %v1966 = vxor.u32 %v1904, 2147483648
      %v1967 = vxor.u32 %v1907, 2147483648
      %v1968 = vxor.u32 %v1912, 2147483648
      %v1969 = vxor.u32 %v1915, 2147483648
      %v1970 = vxor.u32 %v1920, 2147483648
      %v1971 = vxor.u32 %v1923, 2147483648
      %v1972 = vxor.u32 %v1928, 2147483648
      %v1973 = vxor.u32 %v1931, 2147483648
      %v1974 = vxor.u32 %v1936, 2147483648
      %v1975 = vxor.u32 %v1939, 2147483648
      %v1976 = vxor.u32 %v1944, 2147483648
      %v1977 = vxor.u32 %v1947, 2147483648
      %v1978 = vxor.u32 %v1952, 2147483648
      %v1979 = vxor.u32 %v1955, 2147483648
      %v1980 = vxor.u32 %v1960, 2147483648
      %v1981 = vxor.u32 %v1963, 2147483648
      %v1982 = vmul.f32 %v1966, 1.442695
      %v1983 = vpow.pop %v1982
      %v1984 = vmul.f32 %v1967, 1.442695
      %v1985 = vpow.pop %v1984
      %v1986 = vmul.f32 %v1968, 1.442695
      %v1987 = vpow.pop %v1986
      %v1988 = vmul.f32 %v1969, 1.442695
      %v1989 = vpow.pop %v1988
      %v1990 = vmul.f32 %v1970, 1.442695
      %v1991 = vpow.pop %v1990
      %v1992 = vmul.f32 %v1971, 1.442695
      %v1993 = vpow.pop %v1992
      %v1994 = vmul.f32 %v1972, 1.442695
      %v1995 = vpow.pop %v1994
      %v1996 = vmul.f32 %v1973, 1.442695
      %v1997 = vpow.pop %v1996
      %v1998 = vmul.f32 %v1974, 1.442695
      %v1999 = vpow.pop %v1998
      %v2000 = vmul.f32 %v1975, 1.442695
      %v2001 = vpow.pop %v2000
      %v2002 = vmul.f32 %v1976, 1.442695
      %v2003 = vpow.pop %v2002
      %v2004 = vmul.f32 %v1977, 1.442695
      %v2005 = vpow.pop %v2004
      %v2006 = vmul.f32 %v1978, 1.442695
      %v2007 = vpow.pop %v2006
      %v2008 = vmul.f32 %v1979, 1.442695
      %v2009 = vpow.pop %v2008
      %v2010 = vmul.f32 %v1980, 1.442695
      %v2011 = vpow.pop %v2010
      %v2012 = vmul.f32 %v1981, 1.442695
      %v2013 = vpow.pop %v2012
      %v2014 = vadd.f32 %v1983, 1.0
      %v2015 = vadd.f32 %v1985, 1.0
      %v2016 = vadd.f32 %v1987, 1.0
      %v2017 = vadd.f32 %v1989, 1.0
      %v2018 = vadd.f32 %v1991, 1.0
      %v2019 = vadd.f32 %v1993, 1.0
      %v2020 = vadd.f32 %v1995, 1.0
      %v2021 = vadd.f32 %v1997, 1.0
      %v2022 = vadd.f32 %v1999, 1.0
      %v2023 = vadd.f32 %v2001, 1.0
      %v2024 = vadd.f32 %v2003, 1.0
      %v2025 = vadd.f32 %v2005, 1.0
      %v2026 = vadd.f32 %v2007, 1.0
      %v2027 = vadd.f32 %v2009, 1.0
      %v2028 = vadd.f32 %v2011, 1.0
      %v2029 = vadd.f32 %v2013, 1.0
      %v2030 = vrcp.pop %v2014
      %v2031 = vmul.f32 1.0, %v2030
      %v2032 = vrcp.pop %v2015
      %v2033 = vmul.f32 1.0, %v2032
      %v2034 = vrcp.pop %v2016
      %v2035 = vmul.f32 1.0, %v2034
      %v2036 = vrcp.pop %v2017
      %v2037 = vmul.f32 1.0, %v2036
      %v2038 = vrcp.pop %v2018
      %v2039 = vmul.f32 1.0, %v2038
      %v2040 = vrcp.pop %v2019
      %v2041 = vmul.f32 1.0, %v2040
      %v2042 = vrcp.pop %v2020
      %v2043 = vmul.f32 1.0, %v2042
      %v2044 = vrcp.pop %v2021
      %v2045 = vmul.f32 1.0, %v2044
      %v2046 = vrcp.pop %v2022
      %v2047 = vmul.f32 1.0, %v2046
      %v2048 = vrcp.pop %v2023
      %v2049 = vmul.f32 1.0, %v2048
      %v2050 = vrcp.pop %v2024
      %v2051 = vmul.f32 1.0, %v2050
      %v2052 = vrcp.pop %v2025
      %v2053 = vmul.f32 1.0, %v2052
      %v2054 = vrcp.pop %v2026
      %v2055 = vmul.f32 1.0, %v2054
      %v2056 = vrcp.pop %v2027
      %v2057 = vmul.f32 1.0, %v2056
      %v2058 = vrcp.pop %v2028
      %v2059 = vmul.f32 1.0, %v2058
      %v2060 = vrcp.pop %v2029
      %v2061 = vmul.f32 1.0, %v2060
      %v2062 = vld [vmem:[%s13] sm:$0xff]
      %v2063 = vld [vmem:[%s13 + $0x8] sm:$0xff]
      %v2064 = vld [vmem:[%s13 + $0x10] sm:$0xff]
      %v2065 = vld [vmem:[%s13 + $0x18] sm:$0xff]
      %v2066 = vld [vmem:[%s13 + $0x20] sm:$0xff]
      %v2067 = vld [vmem:[%s13 + $0x28] sm:$0xff]
      %v2068 = vld [vmem:[%s13 + $0x30] sm:$0xff]
      %v2069 = vld [vmem:[%s13 + $0x38] sm:$0xff]
      %v2070 = vld [vmem:[%s13 + $0x40] sm:$0xff]
      %v2071 = vld [vmem:[%s13 + $0x48] sm:$0xff]
      %v2072 = vld [vmem:[%s13 + $0x50] sm:$0xff]
      %v2073 = vld [vmem:[%s13 + $0x58] sm:$0xff]
      %v2074 = vld [vmem:[%s13 + $0x60] sm:$0xff]
      %v2075 = vld [vmem:[%s13 + $0x68] sm:$0xff]
      %v2076 = vld [vmem:[%s13 + $0x70] sm:$0xff]
      %v2077 = vld [vmem:[%s13 + $0x78] sm:$0xff]
      %2079 = vset.pattern.permute.xlu0 0
      %2080 = vperm.xlu0 %2079, %v2062
      %v2081 = vpop.permute.xlu0 %2080
      %2084 = vset.pattern.permute.xlu0 0
      %2085 = vperm.xlu0 %2084, %v2063
      %v2086 = vpop.permute.xlu0 %2085
      %2089 = vset.pattern.permute.xlu0 0
      %2090 = vperm.xlu0 %2089, %v2064
      %v2091 = vpop.permute.xlu0 %2090
      %2094 = vset.pattern.permute.xlu0 0
      %2095 = vperm.xlu0 %2094, %v2065
      %v2096 = vpop.permute.xlu0 %2095
      %2099 = vset.pattern.permute.xlu0 0
      %2100 = vperm.xlu0 %2099, %v2066
      %v2101 = vpop.permute.xlu0 %2100
      %2104 = vset.pattern.permute.xlu0 0
      %2105 = vperm.xlu0 %2104, %v2067
      %v2106 = vpop.permute.xlu0 %2105
      %2109 = vset.pattern.permute.xlu0 0
      %2110 = vperm.xlu0 %2109, %v2068
      %v2111 = vpop.permute.xlu0 %2110
      %2114 = vset.pattern.permute.xlu0 0
      %2115 = vperm.xlu0 %2114, %v2069
      %v2116 = vpop.permute.xlu0 %2115
      %2119 = vset.pattern.permute.xlu0 0
      %2120 = vperm.xlu0 %2119, %v2070
      %v2121 = vpop.permute.xlu0 %2120
      %2124 = vset.pattern.permute.xlu0 0
      %2125 = vperm.xlu0 %2124, %v2071
      %v2126 = vpop.permute.xlu0 %2125
      %2129 = vset.pattern.permute.xlu0 0
      %2130 = vperm.xlu0 %2129, %v2072
      %v2131 = vpop.permute.xlu0 %2130
      %2134 = vset.pattern.permute.xlu0 0
      %2135 = vperm.xlu0 %2134, %v2073
      %v2136 = vpop.permute.xlu0 %2135
      %2139 = vset.pattern.permute.xlu0 0
      %2140 = vperm.xlu0 %2139, %v2074
      %v2141 = vpop.permute.xlu0 %2140
      %2144 = vset.pattern.permute.xlu0 0
      %2145 = vperm.xlu0 %2144, %v2075
      %v2146 = vpop.permute.xlu0 %2145
      %2149 = vset.pattern.permute.xlu0 0
      %2150 = vperm.xlu0 %2149, %v2076
      %v2151 = vpop.permute.xlu0 %2150
      %2154 = vset.pattern.permute.xlu0 0
      %2155 = vperm.xlu0 %2154, %v2077
      %v2156 = vpop.permute.xlu0 %2155
      %v2158 = vmul.f32 %v2031, %v2081
      %v2159 = vmul.f32 %v2033, %v2086
      %v2160 = vmul.f32 %v2035, %v2091
      %v2161 = vmul.f32 %v2037, %v2096
      %v2162 = vmul.f32 %v2039, %v2101
      %v2163 = vmul.f32 %v2041, %v2106
      %v2164 = vmul.f32 %v2043, %v2111
      %v2165 = vmul.f32 %v2045, %v2116
      %v2166 = vmul.f32 %v2047, %v2121
      %v2167 = vmul.f32 %v2049, %v2126
      %v2168 = vmul.f32 %v2051, %v2131
      %v2169 = vmul.f32 %v2053, %v2136
      %v2170 = vmul.f32 %v2055, %v2141
      %v2171 = vmul.f32 %v2057, %v2146
      %v2172 = vmul.f32 %v2059, %v2151
      %v2173 = vmul.f32 %v2061, %v2156
      %v2174 = vmax.f32 %v2158, %v2162
      %v2175 = vmax.f32 %v2159, %v2163
      %v2176 = vmax.f32 %v2160, %v2164
      %v2177 = vmax.f32 %v2161, %v2165
      %v2178 = vmax.f32 %v2174, %v2166
      %v2179 = vmax.f32 %v2175, %v2167
      %v2180 = vmax.f32 %v2176, %v2168
      %v2181 = vmax.f32 %v2177, %v2169
      %v2182 = vmax.f32 %v2178, %v2170
      %v2183 = vmax.f32 %v2179, %v2171
      %v2184 = vmax.f32 %v2180, %v2172
      %v2185 = vmax.f32 %v2181, %v2173
      %v2186 = vmax.f32 %v2182, %v2183
      %v2187 = vmax.f32 %v2184, %v2185
      %v2188 = vmax.f32 %v2186, %v2187
      %v2189 = vrot.slane %v2188, 4
      %v2190 = vmax.f32 %v2188, %v2189
      %v2191 = vrot.slane %v2190, 2
      %v2192 = vmax.f32 %v2190, %v2191
      %v2193 = vrot.slane %v2192, 1
      %v2194 = vmax.f32 %v2192, %v2193
      %2195 = vset.pattern.permute.xlu0 1
      %2196 = vperm.xlu0 %2195, %v2062
      %v2197 = vpop.permute.xlu0 %2196
      %2199 = vset.pattern.permute.xlu0 1
      %2200 = vperm.xlu0 %2199, %v2063
      %v2201 = vpop.permute.xlu0 %2200
      %2203 = vset.pattern.permute.xlu0 1
      %2204 = vperm.xlu0 %2203, %v2064
      %v2205 = vpop.permute.xlu0 %2204
      %2207 = vset.pattern.permute.xlu0 1
      %2208 = vperm.xlu0 %2207, %v2065
      %v2209 = vpop.permute.xlu0 %2208
      %2211 = vset.pattern.permute.xlu0 1
      %2212 = vperm.xlu0 %2211, %v2066
      %v2213 = vpop.permute.xlu0 %2212
      %2215 = vset.pattern.permute.xlu0 1
      %2216 = vperm.xlu0 %2215, %v2067
      %v2217 = vpop.permute.xlu0 %2216
      %2219 = vset.pattern.permute.xlu0 1
      %2220 = vperm.xlu0 %2219, %v2068
      %v2221 = vpop.permute.xlu0 %2220
      %2223 = vset.pattern.permute.xlu0 1
      %2224 = vperm.xlu0 %2223, %v2069
      %v2225 = vpop.permute.xlu0 %2224
      %2227 = vset.pattern.permute.xlu0 1
      %2228 = vperm.xlu0 %2227, %v2070
      %v2229 = vpop.permute.xlu0 %2228
      %2231 = vset.pattern.permute.xlu0 1
      %2232 = vperm.xlu0 %2231, %v2071
      %v2233 = vpop.permute.xlu0 %2232
      %2235 = vset.pattern.permute.xlu0 1
      %2236 = vperm.xlu0 %2235, %v2072
      %v2237 = vpop.permute.xlu0 %2236
      %2239 = vset.pattern.permute.xlu0 1
      %2240 = vperm.xlu0 %2239, %v2073
      %v2241 = vpop.permute.xlu0 %2240
      %2243 = vset.pattern.permute.xlu0 1
      %2244 = vperm.xlu0 %2243, %v2074
      %v2245 = vpop.permute.xlu0 %2244
      %2247 = vset.pattern.permute.xlu0 1
      %2248 = vperm.xlu0 %2247, %v2075
      %v2249 = vpop.permute.xlu0 %2248
      %2251 = vset.pattern.permute.xlu0 1
      %2252 = vperm.xlu0 %2251, %v2076
      %v2253 = vpop.permute.xlu0 %2252
      %2255 = vset.pattern.permute.xlu0 1
      %2256 = vperm.xlu0 %2255, %v2077
      %v2257 = vpop.permute.xlu0 %2256
      %v2259 = vmul.f32 %v2031, %v2197
      %v2260 = vmul.f32 %v2033, %v2201
      %v2261 = vmul.f32 %v2035, %v2205
      %v2262 = vmul.f32 %v2037, %v2209
      %v2263 = vmul.f32 %v2039, %v2213
      %v2264 = vmul.f32 %v2041, %v2217
      %v2265 = vmul.f32 %v2043, %v2221
      %v2266 = vmul.f32 %v2045, %v2225
      %v2267 = vmul.f32 %v2047, %v2229
      %v2268 = vmul.f32 %v2049, %v2233
      %v2269 = vmul.f32 %v2051, %v2237
      %v2270 = vmul.f32 %v2053, %v2241
      %v2271 = vmul.f32 %v2055, %v2245
      %v2272 = vmul.f32 %v2057, %v2249
      %v2273 = vmul.f32 %v2059, %v2253
      %v2274 = vmul.f32 %v2061, %v2257
      %v2275 = vmax.f32 %v2259, %v2263
      %v2276 = vmax.f32 %v2260, %v2264
      %v2277 = vmax.f32 %v2261, %v2265
      %v2278 = vmax.f32 %v2262, %v2266
      %v2279 = vmax.f32 %v2275, %v2267
      %v2280 = vmax.f32 %v2276, %v2268
      %v2281 = vmax.f32 %v2277, %v2269
      %v2282 = vmax.f32 %v2278, %v2270
      %v2283 = vmax.f32 %v2279, %v2271
      %v2284 = vmax.f32 %v2280, %v2272
      %v2285 = vmax.f32 %v2281, %v2273
      %v2286 = vmax.f32 %v2282, %v2274
      %v2287 = vmax.f32 %v2283, %v2284
      %v2288 = vmax.f32 %v2285, %v2286
      %v2289 = vmax.f32 %v2287, %v2288
      %v2290 = vrot.slane %v2289, 4
      %v2291 = vmax.f32 %v2289, %v2290
      %v2292 = vrot.slane %v2291, 2
      %v2293 = vmax.f32 %v2291, %v2292
      %v2294 = vrot.slane %v2293, 1
      %v2295 = vmax.f32 %v2293, %v2294
      %vm2296 = vcmask 1040384
      %v2297 = vsel %vm2296, %v2194, %v2295
      %2298 = vst [vmem:[#allocation15] sm:$0x3] %v2297
    $region81: #{tpu_custom_call.1} parent=1 // pred_fallthru
      _
    // Predicated region
    $region82: #{tpu_custom_call.1} parent=1 // pred_check
      _
    $region83: #{tpu_custom_call.1} parent=1 // pred_check_branch
      %2300 = sbr.rel (0) target = $region85
    $region84: #{tpu_custom_call.1} parent=1 // pred_region
      %s2302 = ssub.s32 32, 32
      %2303 = vsyncadd [#allocation8], %s2302
      %s2305 = sshll.u32 [#allocation15], 4
      %s2306 = int_to_ptr.vmem [resolvable:$true] %s2305
      %2308 = dma.vmem_to_hbm [thread:$0]  %s2306, 32, %s14, [#allocation8]
    $region85: #{tpu_custom_call.1} parent=1 // pred_fallthru
      _
    // Predicated region
    $region86: #{tpu_custom_call.1} parent=1 // pred_check
      _
    $region87: #{tpu_custom_call.1} parent=1 // pred_check_branch
      %2310 = sbr.rel (0) target = $region89
    $region88: #{tpu_custom_call.1} parent=1 // pred_region
      %2311 = dma.done [#allocation8], 32
    $region89: #{tpu_custom_call.1} parent=1 // pred_fallthru
      _
    %2312 = vsyncpa [#allocation7], 1
    %2313 = vsyncpa [#allocation10], 1
    %2314 = vsyncpa [#allocation13], 1
    %2315 = vsyncpa [#allocation8], 1

</llo_original>
